<compile_context>
chip_gen: v7x
topology: tpu7x:2x2x1
jax: 0.10.0
libtpu: 0.0.40
codegen_flags: <defaults>
</compile_context>

<pallas_src>
import functools

import numpy as np
import jax
import jax.numpy as jnp
from jax.experimental import pallas as pl
from jax.experimental.pallas import tpu as pltpu


# ---------------------------------------------------------------------------
# Fused SPFM kernel (one grid step = one (batch, channel-split) pair)
# ---------------------------------------------------------------------------
def _spfm_kernel(x_ref, w1_ref, b1_ref, a1_ref,
                 m1_ref, bf1_ref, af1_ref,
                 w2_ref, bf2_ref, af2_ref,
                 m3_ref, bf3_ref, af3_ref,
                 w3_ref, mo_ref, bo_ref, ao_ref,
                 mask1_ref, mask2_ref,
                 o_ref,
                 pad1_ref, pad2_ref, acc_ref,
                 *, W, HW, dil, pad1_off, pad2_off):
    s = pl.program_id(1)

    def prelu(v, alpha):
        return jnp.where(v >= 0, v, alpha * v)

    def im2col(src_ref, base, step, mask):
        # 9 shifted views of the zero-haloed flattened rows, stacked along K.
        taps = []
        for i in range(3):
            for j in range(3):
                off = base + ((i - 1) * W + (j - 1)) * step
                taps.append(src_ref[:, off:off + HW])
        return jnp.concatenate(taps, axis=0) * mask

    x = x_ref[...]                                            # (C, HW)

    # conv_dws1: 3x3, dilation=4, padding=4, C -> 4C (BN scale folded in w1).
    pad1_ref[...] = jnp.zeros_like(pad1_ref)
    pad1_ref[:, pad1_off:pad1_off + HW] = x
    patches1 = im2col(pad1_ref, pad1_off, dil, mask1_ref[...])      # (9C, HW)
    y = jnp.dot(w1_ref[...], patches1, preferred_element_type=jnp.float32)
    y = prelu(y + b1_ref[...], a1_ref[...])                   # (4C, HW) pre-shuffle

    # fusion[0]: 1x1 on cat(br1, b2).  br1 == b2 -> weight halves summed; the
    # pixel shuffle is folded into a block-diagonal (4C, 4C) matrix.
    z = jnp.dot(m1_ref[...], y, preferred_element_type=jnp.float32)
    z = prelu(z + bf1_ref[...], af1_ref[...])

    # fusion[1]: 3x3 pad=1 on the shuffled (2H, 2W) image, re-expressed as a
    # 9-tap conv on the pre-shuffle (4C, H, W) tensor with folded weights.
    pad2_ref[...] = jnp.zeros_like(pad2_ref)
    pad2_ref[:, pad2_off:pad2_off + HW] = z
    patches2 = im2col(pad2_ref, pad2_off, 1, mask2_ref[...])        # (36C, HW)
    u = jnp.dot(w2_ref[...], patches2, preferred_element_type=jnp.float32)
    u = prelu(u + bf2_ref[...], af2_ref[...])

    # fusion[2]: 1x1 (pixel shuffle folded, block diagonal).
    v = jnp.dot(m3_ref[...], u, preferred_element_type=jnp.float32)
    v = prelu(v + bf3_ref[...], af3_ref[...])

    # residual: conv1x1(avgpool(x)) broadcast over spatial
    # (mean over H*W commutes with the 1x1 conv).
    r = jnp.mean(jnp.dot(w3_ref[...], x, preferred_element_type=jnp.float32),
                 axis=1, keepdims=True)                       # (4C, 1)
    rpp = v + r                                               # (4C, HW)

    # SPFM output 1x1 conv (BN scale folded): accumulate over the splits.
    @pl.when(s == 0)
    def _init():
        acc_ref[...] = jnp.zeros_like(acc_ref)

    acc_ref[...] += jnp.dot(mo_ref[...], rpp,
                            preferred_element_type=jnp.float32)

    @pl.when(s == pl.num_programs(1) - 1)
    def _finalize():
        o = prelu(acc_ref[...] + bo_ref[...], ao_ref[...])
        o_ref[...] = o.astype(o_ref.dtype)


# ---------------------------------------------------------------------------
# Wrapper-side weight folding (BN scales, br1==b2, pixel-shuffle algebra)
# ---------------------------------------------------------------------------
def _tap_masks(H, W, dil, chans):
    """(9*chans, H*W) mask: 1 where a horizontal tap stays inside its row.
    Vertical out-of-range taps land in the zero halo of the padded buffer."""
    HW = H * W
    col = np.arange(HW) % W
    blocks = []
    for _i in range(3):
        for j in range(3):
            c2 = col + (j - 1) * dil
            m = ((c2 >= 0) & (c2 < W)).astype(np.float32)
            blocks.append(np.broadcast_to(m, (chans, HW)))
    return jnp.asarray(np.concatenate(blocks, axis=0))


def _ps_tap_map():
    """V[p, r, rp, a] = 1 iff shuffled row 2h+r read at kernel tap offset a-1
    equals pre-shuffle parity rp at spatial offset p-1."""
    V = np.zeros((3, 2, 2, 3), np.float32)
    for r in (0, 1):
        for a in (-1, 0, 1):
            t = r + a
            V[t // 2 + 1, r, t % 2, a + 1] = 1.0
    return jnp.asarray(V)


def _fold_rpp_params(p, C):
    eye4 = jnp.eye(4, dtype=jnp.float32)
    rep4 = lambda v: jnp.repeat(v.reshape(-1, 1), 4, axis=0)

    # conv_dws1 (HWIO 3,3,C,4C) -> (4C, 9C), BN scale folded.
    w1 = jnp.transpose(p["w1"], (3, 0, 1, 2)) * p["s1"].reshape(4 * C, 1, 1, 1)
    w1 = w1.reshape(4 * C, 9 * C)

    # fusion[0] 1x1 (2C -> C): br1 == b2 -> sum the two input halves, then
    # expand block-diagonally over the 4 pixel-shuffle sub-positions.
    wf1 = (p["wf1"][:C] + p["wf1"][C:]).T * p["sf1"].reshape(C, 1)
    m1 = jnp.kron(wf1, eye4)

    # fusion[1] 3x3 pad=1 on the shuffled image -> 9-tap conv in the
    # pre-shuffle channel layout.
    V = _ps_tap_map()
    wf2 = jnp.transpose(p["wf2"], (3, 2, 0, 1)) * p["sf2"].reshape(C, 1, 1, 1)
    m2 = jnp.einsum("prsa,qtub,xyab->pqxrtysu", V, V, wf2)
    m2 = m2.reshape(3, 3, 4 * C, 4 * C)
    w2 = jnp.transpose(m2, (2, 0, 1, 3)).reshape(4 * C, 36 * C)

    # fusion[2] 1x1 (C -> C).
    wf3 = p["wf3"].T * p["sf3"].reshape(C, 1)
    m3 = jnp.kron(wf3, eye4)

    # conv_dws3 (1x1, no BN/act), replicated over the 4 sub-positions.
    w3 = jnp.repeat(p["w3"].T, 4, axis=0)

    return dict(
        w1=w1, b1=p["b1"].reshape(4 * C, 1), a1=p["a1"].reshape(4 * C, 1),
        m1=m1, bf1=rep4(p["bf1"]), af1=rep4(p["af1"]),
        w2=w2, bf2=rep4(p["bf2"]), af2=rep4(p["af2"]),
        m3=m3, bf3=rep4(p["bf3"]), af3=rep4(p["af3"]),
        w3=w3)


def _fold_spfm_params(params, C, S):
    subs = [_fold_rpp_params(params["sub"][i], C) for i in range(S)]
    kp = {k: jnp.stack([sp[k] for sp in subs], axis=0) for k in subs[0]}

    out_ch = params["wo"].shape[-1]
    eye4 = jnp.eye(4, dtype=jnp.float32)
    wo = (params["wo"].T * params["so"].reshape(out_ch, 1)).reshape(out_ch, S, C)
    kp["mo"] = jnp.einsum("osc,kj->sokcj", wo, eye4).reshape(
        S, 4 * out_ch, 4 * C)
    kp["bo"] = jnp.repeat(params["bo"].reshape(out_ch, 1), 4, axis=0)
    kp["ao"] = jnp.repeat(params["ao"].reshape(out_ch, 1), 4, axis=0)
    return kp


# ---------------------------------------------------------------------------
# Public forward
# ---------------------------------------------------------------------------
def spfm_forward(x_nchw, params, num_splits):
    """SPFM forward: NCHW in, NCHW out (spatial doubled by the RPP modules)."""
    N, Cin, H, W = x_nchw.shape
    S = num_splits
    C = Cin // S
    HW = H * W
    out_ch = params["wo"].shape[-1]
    dil = 4

    kp = _fold_spfm_params(params, C, S)
    x = x_nchw.reshape(N, S, C, HW).astype(jnp.float32)

    mask1 = _tap_masks(H, W, dil, C)           # (9C,  HW)
    mask2 = _tap_masks(H, W, 1, 4 * C)         # (36C, HW)

    # 128-lane-aligned zero halo around the flattened rows.
    pad1_off = max(128, -(-(dil * (W + 1)) // 128) * 128)
    pad2_off = max(128, -(-(W + 1) // 128) * 128)

    kern = functools.partial(_spfm_kernel, W=W, HW=HW, dil=dil,
                             pad1_off=pad1_off, pad2_off=pad2_off)

    per_split = lambda n, s: (s, 0, 0)
    shared = lambda n, s: (0, 0)

    out = pl.pallas_call(
        kern,
        out_shape=jax.ShapeDtypeStruct((N, 4 * out_ch, HW), jnp.float32),
        grid=(N, S),
        in_specs=[
            pl.BlockSpec((None, None, C, HW), lambda n, s: (n, s, 0, 0)),
            pl.BlockSpec((None, 4 * C, 9 * C), per_split),
            pl.BlockSpec((None, 4 * C, 1), per_split),
            pl.BlockSpec((None, 4 * C, 1), per_split),
            pl.BlockSpec((None, 4 * C, 4 * C), per_split),
            pl.BlockSpec((None, 4 * C, 1), per_split),
            pl.BlockSpec((None, 4 * C, 1), per_split),
            pl.BlockSpec((None, 4 * C, 36 * C), per_split),
            pl.BlockSpec((None, 4 * C, 1), per_split),
            pl.BlockSpec((None, 4 * C, 1), per_split),
            pl.BlockSpec((None, 4 * C, 4 * C), per_split),
            pl.BlockSpec((None, 4 * C, 1), per_split),
            pl.BlockSpec((None, 4 * C, 1), per_split),
            pl.BlockSpec((None, 4 * C, C), per_split),
            pl.BlockSpec((None, 4 * out_ch, 4 * C), per_split),
            pl.BlockSpec((4 * out_ch, 1), shared),
            pl.BlockSpec((4 * out_ch, 1), shared),
            pl.BlockSpec((9 * C, HW), shared),
            pl.BlockSpec((36 * C, HW), shared),
        ],
        out_specs=pl.BlockSpec((None, 4 * out_ch, HW), lambda n, s: (n, 0, 0)),
        scratch_shapes=[
            pltpu.VMEM((C, HW + 2 * pad1_off), jnp.float32),
            pltpu.VMEM((4 * C, HW + 2 * pad2_off), jnp.float32),
            pltpu.VMEM((4 * out_ch, HW), jnp.float32),
        ],
        compiler_params=pltpu.CompilerParams(
            dimension_semantics=("parallel", "arbitrary")),
    )(x, kp["w1"], kp["b1"], kp["a1"],
      kp["m1"], kp["bf1"], kp["af1"],
      kp["w2"], kp["bf2"], kp["af2"],
      kp["m3"], kp["bf3"], kp["af3"],
      kp["w3"], kp["mo"], kp["bo"], kp["ao"],
      mask1, mask2)

    # Single un-shuffle of the final output (plain-JAX glue) -> NCHW.
    out = out.reshape(N, out_ch, 2, 2, H, W)
    out = jnp.transpose(out, (0, 1, 4, 2, 5, 3))
    return out.reshape(N, out_ch, 2 * H, 2 * W)


# ---------------------------------------------------------------------------
# Plain-JAX (XLA) reference of the module, for a numerical cross-check
# ---------------------------------------------------------------------------
def _conv_ref(x, w_hwio, padding=0, dilation=1):
    return jax.lax.conv_general_dilated(
        x, w_hwio, window_strides=(1, 1),
        padding=[(padding, padding), (padding, padding)],
        rhs_dilation=(dilation, dilation),
        dimension_numbers=("NCHW", "HWIO", "NCHW"))


def _bn_prelu_ref(y, scale, shift, alpha):
    scale = scale.reshape(1, -1, 1, 1)
    shift = shift.reshape(1, -1, 1, 1)
    alpha = alpha.reshape(1, -1, 1, 1)
    y = y * scale + shift
    return jnp.where(y >= 0, y, alpha * y)


def _pixel_shuffle_ref(x, r=2):
    N, Crr, H, W = x.shape
    c = Crr // (r * r)
    x = x.reshape(N, c, r, r, H, W)
    x = jnp.transpose(x, (0, 1, 4, 2, 5, 3))
    return x.reshape(N, c, H * r, W * r)


def _rpp_ref(x, p):
    C = x.shape[1]
    y = _conv_ref(x, p["w1"], padding=4, dilation=4)
    y = _bn_prelu_ref(y, p["s1"], p["b1"], p["a1"])
    y = _pixel_shuffle_ref(y, 2)
    out = jnp.concatenate([y, y], axis=1)                 # br1 == b2
    out = _conv_ref(out, p["wf1"].reshape(1, 1, 2 * C, C))
    out = _bn_prelu_ref(out, p["sf1"], p["bf1"], p["af1"])
    out = _conv_ref(out, p["wf2"], padding=1)
    out = _bn_prelu_ref(out, p["sf2"], p["bf2"], p["af2"])
    out = _conv_ref(out, p["wf3"].reshape(1, 1, C, C))
    out = _bn_prelu_ref(out, p["sf3"], p["bf3"], p["af3"])
    xm = jnp.mean(x, axis=(2, 3), keepdims=True)
    br3 = _conv_ref(xm, p["w3"].reshape(1, 1, C, C))
    return out + br3


def _spfm_reference(x, params, num_splits):
    chunks = jnp.split(x, num_splits, axis=1)
    outs = [_rpp_ref(c, params["sub"][i]) for i, c in enumerate(chunks)]
    out = jnp.concatenate(outs, axis=1)
    cin = out.shape[1]
    cout = params["wo"].shape[-1]
    out = _conv_ref(out, params["wo"].reshape(1, 1, cin, cout))
    return _bn_prelu_ref(out, params["so"], params["bo"], params["ao"])


# ---------------------------------------------------------------------------
# Deterministic parameter construction (eval-mode BN folded to scale/shift)
# ---------------------------------------------------------------------------
def _bn_prelu_params(key, c):
    k1, k2, k3, k4 = jax.random.split(key, 4)
    gamma = 1.0 + 0.1 * jax.random.normal(k1, (c,), jnp.float32)
    beta = 0.1 * jax.random.normal(k2, (c,), jnp.float32)
    mean = 0.1 * jax.random.normal(k3, (c,), jnp.float32)
    var = 1.0 + 0.1 * jax.random.uniform(k4, (c,), jnp.float32)
    eps = 1e-5
    scale = gamma / jnp.sqrt(var + eps)
    shift = beta - mean * scale
    alpha = jnp.full((1, c), 0.25, jnp.float32)            # PReLU default
    return scale.reshape(1, c), shift.reshape(1, c), alpha


def _conv_w(key, kh, kw, cin, cout):
    if kh == 1 and kw == 1:
        return 0.1 * jax.random.normal(key, (cin, cout), jnp.float32)
    return 0.1 * jax.random.normal(key, (kh, kw, cin, cout), jnp.float32)


def make_rpp_params(key, c):
    ks = jax.random.split(key, 10)
    p = {}
    p["w1"] = _conv_w(ks[0], 3, 3, c, 4 * c)
    p["s1"], p["b1"], p["a1"] = _bn_prelu_params(ks[1], 4 * c)
    p["wf1"] = _conv_w(ks[2], 1, 1, 2 * c, c)
    p["sf1"], p["bf1"], p["af1"] = _bn_prelu_params(ks[3], c)
    p["wf2"] = _conv_w(ks[4], 3, 3, c, c)
    p["sf2"], p["bf2"], p["af2"] = _bn_prelu_params(ks[5], c)
    p["wf3"] = _conv_w(ks[6], 1, 1, c, c)
    p["sf3"], p["bf3"], p["af3"] = _bn_prelu_params(ks[7], c)
    p["w3"] = _conv_w(ks[8], 1, 1, c, c)                   # conv_dws3, no BN
    return p


def make_spfm_params(key, in_channels, out_channels, num_splits):
    group = in_channels // num_splits
    keys = jax.random.split(key, num_splits + 2)
    params = {"sub": [make_rpp_params(keys[i], group)
                      for i in range(num_splits)]}
    params["wo"] = _conv_w(keys[-2], 1, 1, in_channels, out_channels)
    params["so"], params["bo"], params["ao"] = _bn_prelu_params(
        keys[-1], out_channels)
    return params


# ---------------------------------------------------------------------------
if __name__ == "__main__":
    IN_CH, OUT_CH, NUM_SPLITS = 4, 8, 2
    N, H, W = 2, 16, 16

    key = jax.random.PRNGKey(0)
    kx, kparam = jax.random.split(key)
    x = jax.random.normal(kx, (N, IN_CH, H, W), jnp.float32)   # NCHW input
    params = make_spfm_params(kparam, IN_CH, OUT_CH, NUM_SPLITS)

    fwd = jax.jit(spfm_forward, static_argnums=2)
    out = jax.block_until_ready(fwd(x, params, NUM_SPLITS))

    assert out.shape == (N, OUT_CH, 2 * H, 2 * W), out.shape
    assert bool(jnp.all(jnp.isfinite(out)))

    # Numerical cross-check against a straightforward XLA implementation.
    ref = jax.block_until_ready(
        jax.jit(_spfm_reference, static_argnums=2)(x, params, NUM_SPLITS))
    err = float(jnp.max(jnp.abs(out - ref)))
    assert err < 5e-2, f"max abs diff vs reference: {err}"

    print("KERNEL_OK")
</pallas_src>

<mosaic_0001>
module attributes {stable_mosaic.version = 11 : i64} {
  func.func @_spfm_kernel(%arg0: i32, %arg1: i32, %arg2: memref<1x1x2x256xf32, #tpu.memory_space<vmem>>, %arg3: memref<1x8x18xf32, #tpu.memory_space<vmem>>, %arg4: memref<1x8x1xf32, #tpu.memory_space<vmem>>, %arg5: memref<1x8x1xf32, #tpu.memory_space<vmem>>, %arg6: memref<1x8x8xf32, #tpu.memory_space<vmem>>, %arg7: memref<1x8x1xf32, #tpu.memory_space<vmem>>, %arg8: memref<1x8x1xf32, #tpu.memory_space<vmem>>, %arg9: memref<1x8x72xf32, #tpu.memory_space<vmem>>, %arg10: memref<1x8x1xf32, #tpu.memory_space<vmem>>, %arg11: memref<1x8x1xf32, #tpu.memory_space<vmem>>, %arg12: memref<1x8x8xf32, #tpu.memory_space<vmem>>, %arg13: memref<1x8x1xf32, #tpu.memory_space<vmem>>, %arg14: memref<1x8x1xf32, #tpu.memory_space<vmem>>, %arg15: memref<1x8x2xf32, #tpu.memory_space<vmem>>, %arg16: memref<1x32x8xf32, #tpu.memory_space<vmem>>, %arg17: memref<32x1xf32, #tpu.memory_space<vmem>>, %arg18: memref<32x1xf32, #tpu.memory_space<vmem>>, %arg19: memref<18x256xf32, #tpu.memory_space<vmem>>, %arg20: memref<72x256xf32, #tpu.memory_space<vmem>>, %arg21: memref<1x32x256xf32, #tpu.memory_space<vmem>>, %arg22: memref<2x512xf32, #tpu.memory_space<vmem>>, %arg23: memref<8x512xf32, #tpu.memory_space<vmem>>, %arg24: memref<32x256xf32, #tpu.memory_space<vmem>>) attributes {dimension_semantics = [#tpu.dimension_semantics<parallel>, #tpu.dimension_semantics<arbitrary>], iteration_bounds = array<i64: 2, 2>, scalar_prefetch = 0 : i64, scratch_operands = 3 : i64, tpu.core_type = #tpu.core_type<tc>, window_params = [{transform_indices = @transform_0, window_bounds = array<i64: 1, 1, 2, 256>}, {transform_indices = @transform_1, window_bounds = array<i64: 1, 8, 18>}, {transform_indices = @transform_2, window_bounds = array<i64: 1, 8, 1>}, {transform_indices = @transform_3, window_bounds = array<i64: 1, 8, 1>}, {transform_indices = @transform_4, window_bounds = array<i64: 1, 8, 8>}, {transform_indices = @transform_5, window_bounds = array<i64: 1, 8, 1>}, {transform_indices = @transform_6, window_bounds = array<i64: 1, 8, 1>}, {transform_indices = @transform_7, window_bounds = array<i64: 1, 8, 72>}, {transform_indices = @transform_8, window_bounds = array<i64: 1, 8, 1>}, {transform_indices = @transform_9, window_bounds = array<i64: 1, 8, 1>}, {transform_indices = @transform_10, window_bounds = array<i64: 1, 8, 8>}, {transform_indices = @transform_11, window_bounds = array<i64: 1, 8, 1>}, {transform_indices = @transform_12, window_bounds = array<i64: 1, 8, 1>}, {transform_indices = @transform_13, window_bounds = array<i64: 1, 8, 2>}, {transform_indices = @transform_14, window_bounds = array<i64: 1, 32, 8>}, {pipeline_mode = #tpu.pipeline_mode<synchronous>, transform_indices = @transform_15, window_bounds = array<i64: 32, 1>}, {pipeline_mode = #tpu.pipeline_mode<synchronous>, transform_indices = @transform_16, window_bounds = array<i64: 32, 1>}, {pipeline_mode = #tpu.pipeline_mode<synchronous>, transform_indices = @transform_17, window_bounds = array<i64: 18, 256>}, {pipeline_mode = #tpu.pipeline_mode<synchronous>, transform_indices = @transform_18, window_bounds = array<i64: 72, 256>}, {transform_indices = @transform_19, window_bounds = array<i64: 1, 32, 256>}]} {
    %c0 = arith.constant 0 : index
    %c0_0 = arith.constant 0 : index
    %c0_1 = arith.constant 0 : index
    %c0_2 = arith.constant 0 : index
    %0 = vector.load %arg2[%c0, %c0_0, %c0_1, %c0_2] : memref<1x1x2x256xf32, #tpu.memory_space<vmem>>, vector<1x1x2x256xf32>
    %1 = vector.shape_cast %0 : vector<1x1x2x256xf32> to vector<2x256xf32>
    %cst = arith.constant 0.000000e+00 : f32
    %2 = vector.broadcast %cst : f32 to vector<2x512xf32>
    %c0_3 = arith.constant 0 : index
    %c0_4 = arith.constant 0 : index
    %3 = vector.load %arg22[%c0_3, %c0_4] : memref<2x512xf32, #tpu.memory_space<vmem>>, vector<2x512xf32>
    tpu.vector_store %arg22[%c0_3, %c0_4], %2 {strides = array<i32>} : memref<2x512xf32, #tpu.memory_space<vmem>>, vector<2x512xf32>,
    %c0_5 = arith.constant 0 : index
    %c128 = arith.constant 128 : index
    %4 = vector.load %arg22[%c0_5, %c128] : memref<2x512xf32, #tpu.memory_space<vmem>>, vector<2x256xf32>
    tpu.vector_store %arg22[%c0_5, %c128], %1 {strides = array<i32>} : memref<2x512xf32, #tpu.memory_space<vmem>>, vector<2x256xf32>,
    %c0_6 = arith.constant 0 : index
    %c0_7 = arith.constant 0 : index
    %5 = vector.load %arg19[%c0_6, %c0_7] : memref<18x256xf32, #tpu.memory_space<vmem>>, vector<18x256xf32>
    %c0_8 = arith.constant 0 : index
    %c60 = arith.constant 60 : index
    %6 = vector.load %arg22[%c0_8, %c60] : memref<2x512xf32, #tpu.memory_space<vmem>>, vector<2x256xf32>
    %c0_9 = arith.constant 0 : index
    %c64 = arith.constant 64 : index
    %7 = vector.load %arg22[%c0_9, %c64] : memref<2x512xf32, #tpu.memory_space<vmem>>, vector<2x256xf32>
    %c0_10 = arith.constant 0 : index
    %c68 = arith.constant 68 : index
    %8 = vector.load %arg22[%c0_10, %c68] : memref<2x512xf32, #tpu.memory_space<vmem>>, vector<2x256xf32>
    %c0_11 = arith.constant 0 : index
    %c124 = arith.constant 124 : index
    %9 = vector.load %arg22[%c0_11, %c124] : memref<2x512xf32, #tpu.memory_space<vmem>>, vector<2x256xf32>
    %c0_12 = arith.constant 0 : index
    %c128_13 = arith.constant 128 : index
    %10 = vector.load %arg22[%c0_12, %c128_13] : memref<2x512xf32, #tpu.memory_space<vmem>>, vector<2x256xf32>
    %c0_14 = arith.constant 0 : index
    %c132 = arith.constant 132 : index
    %11 = vector.load %arg22[%c0_14, %c132] : memref<2x512xf32, #tpu.memory_space<vmem>>, vector<2x256xf32>
    %c0_15 = arith.constant 0 : index
    %c188 = arith.constant 188 : index
    %12 = vector.load %arg22[%c0_15, %c188] : memref<2x512xf32, #tpu.memory_space<vmem>>, vector<2x256xf32>
    %c0_16 = arith.constant 0 : index
    %c192 = arith.constant 192 : index
    %13 = vector.load %arg22[%c0_16, %c192] : memref<2x512xf32, #tpu.memory_space<vmem>>, vector<2x256xf32>
    %c0_17 = arith.constant 0 : index
    %c196 = arith.constant 196 : index
    %14 = vector.load %arg22[%c0_17, %c196] : memref<2x512xf32, #tpu.memory_space<vmem>>, vector<2x256xf32>
    %15 = tpu.concatenate %6, %7, %8, %9, %10, %11, %12, %13, %14 in 0 : vector<2x256xf32>, vector<2x256xf32>, vector<2x256xf32>, vector<2x256xf32>, vector<2x256xf32>, vector<2x256xf32>, vector<2x256xf32>, vector<2x256xf32>, vector<2x256xf32> -> vector<18x256xf32>
    %16 = arith.mulf %15, %5 : vector<18x256xf32>
    %c0_18 = arith.constant 0 : index
    %c0_19 = arith.constant 0 : index
    %c0_20 = arith.constant 0 : index
    %17 = vector.load %arg3[%c0_18, %c0_19, %c0_20] : memref<1x8x18xf32, #tpu.memory_space<vmem>>, vector<1x8x18xf32>
    %18 = vector.shape_cast %17 : vector<1x8x18xf32> to vector<8x18xf32>
    %cst_21 = arith.constant dense<0.000000e+00> : vector<8x256xf32>
    %19 = tpu.matmul %18, %16, %cst_21 {dimension_numbers = #tpu.dot_dimension_numbers<[1], [0], [0], [1], [0, 0, 1, 1], [], []>} : vector<8x18xf32>, vector<18x256xf32>, vector<8x256xf32> -> vector<8x256xf32>
    %c0_22 = arith.constant 0 : index
    %c0_23 = arith.constant 0 : index
    %c0_24 = arith.constant 0 : index
    %20 = vector.load %arg4[%c0_22, %c0_23, %c0_24] : memref<1x8x1xf32, #tpu.memory_space<vmem>>, vector<1x8x1xf32>
    %21 = vector.shape_cast %20 : vector<1x8x1xf32> to vector<8x1xf32>
    %22 = vector.broadcast %21 : vector<8x1xf32> to vector<8x256xf32>
    %23 = arith.addf %19, %22 : vector<8x256xf32>
    %c0_25 = arith.constant 0 : index
    %c0_26 = arith.constant 0 : index
    %c0_27 = arith.constant 0 : index
    %24 = vector.load %arg5[%c0_25, %c0_26, %c0_27] : memref<1x8x1xf32, #tpu.memory_space<vmem>>, vector<1x8x1xf32>
    %25 = vector.shape_cast %24 : vector<1x8x1xf32> to vector<8x1xf32>
    %cst_28 = arith.constant 0.000000e+00 : f32
    %26 = vector.broadcast %cst_28 : f32 to vector<8x256xf32>
    %27 = arith.cmpf oge, %23, %26 : vector<8x256xf32>
    %28 = vector.broadcast %25 : vector<8x1xf32> to vector<8x256xf32>
    %29 = arith.mulf %28, %23 : vector<8x256xf32>
    %30 = arith.select %27, %23, %29 : vector<8x256xi1>, vector<8x256xf32>
    %c0_29 = arith.constant 0 : index
    %c0_30 = arith.constant 0 : index
    %c0_31 = arith.constant 0 : index
    %31 = vector.load %arg6[%c0_29, %c0_30, %c0_31] : memref<1x8x8xf32, #tpu.memory_space<vmem>>, vector<1x8x8xf32>
    %32 = vector.shape_cast %31 : vector<1x8x8xf32> to vector<8x8xf32>
    %cst_32 = arith.constant dense<0.000000e+00> : vector<8x256xf32>
    %33 = tpu.matmul %32, %30, %cst_32 {dimension_numbers = #tpu.dot_dimension_numbers<[1], [0], [0], [1], [0, 0, 1, 1], [], []>} : vector<8x8xf32>, vector<8x256xf32>, vector<8x256xf32> -> vector<8x256xf32>
    %c0_33 = arith.constant 0 : index
    %c0_34 = arith.constant 0 : index
    %c0_35 = arith.constant 0 : index
    %34 = vector.load %arg7[%c0_33, %c0_34, %c0_35] : memref<1x8x1xf32, #tpu.memory_space<vmem>>, vector<1x8x1xf32>
    %35 = vector.shape_cast %34 : vector<1x8x1xf32> to vector<8x1xf32>
    %36 = vector.broadcast %35 : vector<8x1xf32> to vector<8x256xf32>
    %37 = arith.addf %33, %36 : vector<8x256xf32>
    %c0_36 = arith.constant 0 : index
    %c0_37 = arith.constant 0 : index
    %c0_38 = arith.constant 0 : index
    %38 = vector.load %arg8[%c0_36, %c0_37, %c0_38] : memref<1x8x1xf32, #tpu.memory_space<vmem>>, vector<1x8x1xf32>
    %39 = vector.shape_cast %38 : vector<1x8x1xf32> to vector<8x1xf32>
    %cst_39 = arith.constant 0.000000e+00 : f32
    %40 = vector.broadcast %cst_39 : f32 to vector<8x256xf32>
    %41 = arith.cmpf oge, %37, %40 : vector<8x256xf32>
    %42 = vector.broadcast %39 : vector<8x1xf32> to vector<8x256xf32>
    %43 = arith.mulf %42, %37 : vector<8x256xf32>
    %44 = arith.select %41, %37, %43 : vector<8x256xi1>, vector<8x256xf32>
    %cst_40 = arith.constant 0.000000e+00 : f32
    %45 = vector.broadcast %cst_40 : f32 to vector<8x512xf32>
    %c0_41 = arith.constant 0 : index
    %c0_42 = arith.constant 0 : index
    %46 = vector.load %arg23[%c0_41, %c0_42] : memref<8x512xf32, #tpu.memory_space<vmem>>, vector<8x512xf32>
    tpu.vector_store %arg23[%c0_41, %c0_42], %45 {strides = array<i32>} : memref<8x512xf32, #tpu.memory_space<vmem>>, vector<8x512xf32>,
    %c0_43 = arith.constant 0 : index
    %c128_44 = arith.constant 128 : index
    %47 = vector.load %arg23[%c0_43, %c128_44] : memref<8x512xf32, #tpu.memory_space<vmem>>, vector<8x256xf32>
    tpu.vector_store %arg23[%c0_43, %c128_44], %44 {strides = array<i32>} : memref<8x512xf32, #tpu.memory_space<vmem>>, vector<8x256xf32>,
    %c0_45 = arith.constant 0 : index
    %c0_46 = arith.constant 0 : index
    %48 = vector.load %arg20[%c0_45, %c0_46] : memref<72x256xf32, #tpu.memory_space<vmem>>, vector<72x256xf32>
    %c0_47 = arith.constant 0 : index
    %c111 = arith.constant 111 : index
    %49 = vector.load %arg23[%c0_47, %c111] : memref<8x512xf32, #tpu.memory_space<vmem>>, vector<8x256xf32>
    %c0_48 = arith.constant 0 : index
    %c112 = arith.constant 112 : index
    %50 = vector.load %arg23[%c0_48, %c112] : memref<8x512xf32, #tpu.memory_space<vmem>>, vector<8x256xf32>
    %c0_49 = arith.constant 0 : index
    %c113 = arith.constant 113 : index
    %51 = vector.load %arg23[%c0_49, %c113] : memref<8x512xf32, #tpu.memory_space<vmem>>, vector<8x256xf32>
    %c0_50 = arith.constant 0 : index
    %c127 = arith.constant 127 : index
    %52 = vector.load %arg23[%c0_50, %c127] : memref<8x512xf32, #tpu.memory_space<vmem>>, vector<8x256xf32>
    %c0_51 = arith.constant 0 : index
    %c128_52 = arith.constant 128 : index
    %53 = vector.load %arg23[%c0_51, %c128_52] : memref<8x512xf32, #tpu.memory_space<vmem>>, vector<8x256xf32>
    %c0_53 = arith.constant 0 : index
    %c129 = arith.constant 129 : index
    %54 = vector.load %arg23[%c0_53, %c129] : memref<8x512xf32, #tpu.memory_space<vmem>>, vector<8x256xf32>
    %c0_54 = arith.constant 0 : index
    %c143 = arith.constant 143 : index
    %55 = vector.load %arg23[%c0_54, %c143] : memref<8x512xf32, #tpu.memory_space<vmem>>, vector<8x256xf32>
    %c0_55 = arith.constant 0 : index
    %c144 = arith.constant 144 : index
    %56 = vector.load %arg23[%c0_55, %c144] : memref<8x512xf32, #tpu.memory_space<vmem>>, vector<8x256xf32>
    %c0_56 = arith.constant 0 : index
    %c145 = arith.constant 145 : index
    %57 = vector.load %arg23[%c0_56, %c145] : memref<8x512xf32, #tpu.memory_space<vmem>>, vector<8x256xf32>
    %58 = tpu.concatenate %49, %50, %51, %52, %53, %54, %55, %56, %57 in 0 : vector<8x256xf32>, vector<8x256xf32>, vector<8x256xf32>, vector<8x256xf32>, vector<8x256xf32>, vector<8x256xf32>, vector<8x256xf32>, vector<8x256xf32>, vector<8x256xf32> -> vector<72x256xf32>
    %59 = arith.mulf %58, %48 : vector<72x256xf32>
    %c0_57 = arith.constant 0 : index
    %c0_58 = arith.constant 0 : index
    %c0_59 = arith.constant 0 : index
    %60 = vector.load %arg9[%c0_57, %c0_58, %c0_59] : memref<1x8x72xf32, #tpu.memory_space<vmem>>, vector<1x8x72xf32>
    %61 = vector.shape_cast %60 : vector<1x8x72xf32> to vector<8x72xf32>
    %cst_60 = arith.constant dense<0.000000e+00> : vector<8x256xf32>
    %62 = tpu.matmul %61, %59, %cst_60 {dimension_numbers = #tpu.dot_dimension_numbers<[1], [0], [0], [1], [0, 0, 1, 1], [], []>} : vector<8x72xf32>, vector<72x256xf32>, vector<8x256xf32> -> vector<8x256xf32>
    %c0_61 = arith.constant 0 : index
    %c0_62 = arith.constant 0 : index
    %c0_63 = arith.constant 0 : index
    %63 = vector.load %arg10[%c0_61, %c0_62, %c0_63] : memref<1x8x1xf32, #tpu.memory_space<vmem>>, vector<1x8x1xf32>
    %64 = vector.shape_cast %63 : vector<1x8x1xf32> to vector<8x1xf32>
    %65 = vector.broadcast %64 : vector<8x1xf32> to vector<8x256xf32>
    %66 = arith.addf %62, %65 : vector<8x256xf32>
    %c0_64 = arith.constant 0 : index
    %c0_65 = arith.constant 0 : index
    %c0_66 = arith.constant 0 : index
    %67 = vector.load %arg11[%c0_64, %c0_65, %c0_66] : memref<1x8x1xf32, #tpu.memory_space<vmem>>, vector<1x8x1xf32>
    %68 = vector.shape_cast %67 : vector<1x8x1xf32> to vector<8x1xf32>
    %cst_67 = arith.constant 0.000000e+00 : f32
    %69 = vector.broadcast %cst_67 : f32 to vector<8x256xf32>
    %70 = arith.cmpf oge, %66, %69 : vector<8x256xf32>
    %71 = vector.broadcast %68 : vector<8x1xf32> to vector<8x256xf32>
    %72 = arith.mulf %71, %66 : vector<8x256xf32>
    %73 = arith.select %70, %66, %72 : vector<8x256xi1>, vector<8x256xf32>
    %c0_68 = arith.constant 0 : index
    %c0_69 = arith.constant 0 : index
    %c0_70 = arith.constant 0 : index
    %74 = vector.load %arg12[%c0_68, %c0_69, %c0_70] : memref<1x8x8xf32, #tpu.memory_space<vmem>>, vector<1x8x8xf32>
    %75 = vector.shape_cast %74 : vector<1x8x8xf32> to vector<8x8xf32>
    %cst_71 = arith.constant dense<0.000000e+00> : vector<8x256xf32>
    %76 = tpu.matmul %75, %73, %cst_71 {dimension_numbers = #tpu.dot_dimension_numbers<[1], [0], [0], [1], [0, 0, 1, 1], [], []>} : vector<8x8xf32>, vector<8x256xf32>, vector<8x256xf32> -> vector<8x256xf32>
    %c0_72 = arith.constant 0 : index
    %c0_73 = arith.constant 0 : index
    %c0_74 = arith.constant 0 : index
    %77 = vector.load %arg13[%c0_72, %c0_73, %c0_74] : memref<1x8x1xf32, #tpu.memory_space<vmem>>, vector<1x8x1xf32>
    %78 = vector.shape_cast %77 : vector<1x8x1xf32> to vector<8x1xf32>
    %79 = vector.broadcast %78 : vector<8x1xf32> to vector<8x256xf32>
    %80 = arith.addf %76, %79 : vector<8x256xf32>
    %c0_75 = arith.constant 0 : index
    %c0_76 = arith.constant 0 : index
    %c0_77 = arith.constant 0 : index
    %81 = vector.load %arg14[%c0_75, %c0_76, %c0_77] : memref<1x8x1xf32, #tpu.memory_space<vmem>>, vector<1x8x1xf32>
    %82 = vector.shape_cast %81 : vector<1x8x1xf32> to vector<8x1xf32>
    %cst_78 = arith.constant 0.000000e+00 : f32
    %83 = vector.broadcast %cst_78 : f32 to vector<8x256xf32>
    %84 = arith.cmpf oge, %80, %83 : vector<8x256xf32>
    %85 = vector.broadcast %82 : vector<8x1xf32> to vector<8x256xf32>
    %86 = arith.mulf %85, %80 : vector<8x256xf32>
    %87 = arith.select %84, %80, %86 : vector<8x256xi1>, vector<8x256xf32>
    %c0_79 = arith.constant 0 : index
    %c0_80 = arith.constant 0 : index
    %c0_81 = arith.constant 0 : index
    %88 = vector.load %arg15[%c0_79, %c0_80, %c0_81] : memref<1x8x2xf32, #tpu.memory_space<vmem>>, vector<1x8x2xf32>
    %89 = vector.shape_cast %88 : vector<1x8x2xf32> to vector<8x2xf32>
    %cst_82 = arith.constant dense<0.000000e+00> : vector<8x256xf32>
    %90 = tpu.matmul %89, %1, %cst_82 {dimension_numbers = #tpu.dot_dimension_numbers<[1], [0], [0], [1], [0, 0, 1, 1], [], []>} : vector<8x2xf32>, vector<2x256xf32>, vector<8x256xf32> -> vector<8x256xf32>
    %cst_83 = arith.constant dense<0.000000e+00> : vector<8xf32>
    %91 = vector.multi_reduction <add>, %90, %cst_83 [1] : vector<8x256xf32> to vector<8xf32>
    %92 = vector.shape_cast %91 : vector<8xf32> to vector<8x1xf32>
    %cst_84 = arith.constant 2.560000e+02 : f32
    %93 = vector.broadcast %cst_84 : f32 to vector<8x1xf32>
    %94 = arith.divf %92, %93 : vector<8x1xf32>
    %95 = vector.broadcast %94 : vector<8x1xf32> to vector<8x256xf32>
    %96 = arith.addf %87, %95 : vector<8x256xf32>
    %c0_i32 = arith.constant 0 : i32
    %97 = arith.cmpi eq, %arg1, %c0_i32 : i32
    %98 = arith.extui %97 : i1 to i32
    %c0_i32_85 = arith.constant 0 : i32
    %99 = arith.cmpi ne, %98, %c0_i32_85 : i32
    scf.if %99 {
      %cst_95 = arith.constant 0.000000e+00 : f32
      %109 = vector.broadcast %cst_95 : f32 to vector<32x256xf32>
      %c0_96 = arith.constant 0 : index
      %c0_97 = arith.constant 0 : index
      %110 = vector.load %arg24[%c0_96, %c0_97] : memref<32x256xf32, #tpu.memory_space<vmem>>, vector<32x256xf32>
      tpu.vector_store %arg24[%c0_96, %c0_97], %109 {strides = array<i32>} : memref<32x256xf32, #tpu.memory_space<vmem>>, vector<32x256xf32>,
    } else {
    }
    %c0_86 = arith.constant 0 : index
    %c0_87 = arith.constant 0 : index
    %100 = vector.load %arg24[%c0_86, %c0_87] : memref<32x256xf32, #tpu.memory_space<vmem>>, vector<32x256xf32>
    %c0_88 = arith.constant 0 : index
    %c0_89 = arith.constant 0 : index
    %c0_90 = arith.constant 0 : index
    %101 = vector.load %arg16[%c0_88, %c0_89, %c0_90] : memref<1x32x8xf32, #tpu.memory_space<vmem>>, vector<1x32x8xf32>
    %102 = vector.shape_cast %101 : vector<1x32x8xf32> to vector<32x8xf32>
    %cst_91 = arith.constant dense<0.000000e+00> : vector<32x256xf32>
    %103 = tpu.matmul %102, %96, %cst_91 {dimension_numbers = #tpu.dot_dimension_numbers<[1], [0], [0], [1], [0, 0, 1, 1], [], []>} : vector<32x8xf32>, vector<8x256xf32>, vector<32x256xf32> -> vector<32x256xf32>
    %104 = arith.addf %100, %103 : vector<32x256xf32>
    %c0_92 = arith.constant 0 : index
    %c0_93 = arith.constant 0 : index
    %105 = vector.load %arg24[%c0_92, %c0_93] : memref<32x256xf32, #tpu.memory_space<vmem>>, vector<32x256xf32>
    tpu.vector_store %arg24[%c0_92, %c0_93], %104 {strides = array<i32>} : memref<32x256xf32, #tpu.memory_space<vmem>>, vector<32x256xf32>,
    %c1_i32 = arith.constant 1 : i32
    %106 = arith.cmpi eq, %arg1, %c1_i32 : i32
    %107 = arith.extui %106 : i1 to i32
    %c0_i32_94 = arith.constant 0 : i32
    %108 = arith.cmpi ne, %107, %c0_i32_94 : i32
    scf.if %108 {
      %c0_95 = arith.constant 0 : index
      %c0_96 = arith.constant 0 : index
      %109 = vector.load %arg24[%c0_95, %c0_96] : memref<32x256xf32, #tpu.memory_space<vmem>>, vector<32x256xf32>
      %c0_97 = arith.constant 0 : index
      %c0_98 = arith.constant 0 : index
      %110 = vector.load %arg17[%c0_97, %c0_98] : memref<32x1xf32, #tpu.memory_space<vmem>>, vector<32x1xf32>
      %111 = vector.broadcast %110 : vector<32x1xf32> to vector<32x256xf32>
      %112 = arith.addf %109, %111 : vector<32x256xf32>
      %c0_99 = arith.constant 0 : index
      %c0_100 = arith.constant 0 : index
      %113 = vector.load %arg18[%c0_99, %c0_100] : memref<32x1xf32, #tpu.memory_space<vmem>>, vector<32x1xf32>
      %cst_101 = arith.constant 0.000000e+00 : f32
      %114 = vector.broadcast %cst_101 : f32 to vector<32x256xf32>
      %115 = arith.cmpf oge, %112, %114 : vector<32x256xf32>
      %116 = vector.broadcast %113 : vector<32x1xf32> to vector<32x256xf32>
      %117 = arith.mulf %116, %112 : vector<32x256xf32>
      %118 = arith.select %115, %112, %117 : vector<32x256xi1>, vector<32x256xf32>
      %c0_102 = arith.constant 0 : index
      %c0_103 = arith.constant 0 : index
      %c0_104 = arith.constant 0 : index
      %119 = vector.load %arg21[%c0_102, %c0_103, %c0_104] : memref<1x32x256xf32, #tpu.memory_space<vmem>>, vector<1x32x256xf32>
      %120 = vector.shape_cast %119 : vector<1x32x256xf32> to vector<32x256xf32>
      %121 = vector.shape_cast %118 : vector<32x256xf32> to vector<1x32x256xf32>
      tpu.vector_store %arg21[%c0_102, %c0_103, %c0_104], %121 {strides = array<i32>} : memref<1x32x256xf32, #tpu.memory_space<vmem>>, vector<1x32x256xf32>,
    } else {
    }
    return
  }
  func.func @transform_0(%arg0: i32, %arg1: i32) -> (i32, i32, i32, i32) {
    %c0_i32 = arith.constant 0 : i32
    %c0_i32_0 = arith.constant 0 : i32
    %c0_i32_1 = arith.constant 0 : i32
    return %arg0, %arg1, %c0_i32, %c0_i32_0 : i32, i32, i32, i32
  }
  func.func @transform_1(%arg0: i32, %arg1: i32) -> (i32, i32, i32) {
    %c0_i32 = arith.constant 0 : i32
    %c0_i32_0 = arith.constant 0 : i32
    %c0_i32_1 = arith.constant 0 : i32
    return %arg1, %c0_i32, %c0_i32_0 : i32, i32, i32
  }
  func.func @transform_2(%arg0: i32, %arg1: i32) -> (i32, i32, i32) {
    %c0_i32 = arith.constant 0 : i32
    %c0_i32_0 = arith.constant 0 : i32
    %c0_i32_1 = arith.constant 0 : i32
    return %arg1, %c0_i32, %c0_i32_0 : i32, i32, i32
  }
  func.func @transform_3(%arg0: i32, %arg1: i32) -> (i32, i32, i32) {
    %c0_i32 = arith.constant 0 : i32
    %c0_i32_0 = arith.constant 0 : i32
    %c0_i32_1 = arith.constant 0 : i32
    return %arg1, %c0_i32, %c0_i32_0 : i32, i32, i32
  }
  func.func @transform_4(%arg0: i32, %arg1: i32) -> (i32, i32, i32) {
    %c0_i32 = arith.constant 0 : i32
    %c0_i32_0 = arith.constant 0 : i32
    %c0_i32_1 = arith.constant 0 : i32
    return %arg1, %c0_i32, %c0_i32_0 : i32, i32, i32
  }
  func.func @transform_5(%arg0: i32, %arg1: i32) -> (i32, i32, i32) {
    %c0_i32 = arith.constant 0 : i32
    %c0_i32_0 = arith.constant 0 : i32
    %c0_i32_1 = arith.constant 0 : i32
    return %arg1, %c0_i32, %c0_i32_0 : i32, i32, i32
  }
  func.func @transform_6(%arg0: i32, %arg1: i32) -> (i32, i32, i32) {
    %c0_i32 = arith.constant 0 : i32
    %c0_i32_0 = arith.constant 0 : i32
    %c0_i32_1 = arith.constant 0 : i32
    return %arg1, %c0_i32, %c0_i32_0 : i32, i32, i32
  }
  func.func @transform_7(%arg0: i32, %arg1: i32) -> (i32, i32, i32) {
    %c0_i32 = arith.constant 0 : i32
    %c0_i32_0 = arith.constant 0 : i32
    %c0_i32_1 = arith.constant 0 : i32
    return %arg1, %c0_i32, %c0_i32_0 : i32, i32, i32
  }
  func.func @transform_8(%arg0: i32, %arg1: i32) -> (i32, i32, i32) {
    %c0_i32 = arith.constant 0 : i32
    %c0_i32_0 = arith.constant 0 : i32
    %c0_i32_1 = arith.constant 0 : i32
    return %arg1, %c0_i32, %c0_i32_0 : i32, i32, i32
  }
  func.func @transform_9(%arg0: i32, %arg1: i32) -> (i32, i32, i32) {
    %c0_i32 = arith.constant 0 : i32
    %c0_i32_0 = arith.constant 0 : i32
    %c0_i32_1 = arith.constant 0 : i32
    return %arg1, %c0_i32, %c0_i32_0 : i32, i32, i32
  }
  func.func @transform_10(%arg0: i32, %arg1: i32) -> (i32, i32, i32) {
    %c0_i32 = arith.constant 0 : i32
    %c0_i32_0 = arith.constant 0 : i32
    %c0_i32_1 = arith.constant 0 : i32
    return %arg1, %c0_i32, %c0_i32_0 : i32, i32, i32
  }
  func.func @transform_11(%arg0: i32, %arg1: i32) -> (i32, i32, i32) {
    %c0_i32 = arith.constant 0 : i32
    %c0_i32_0 = arith.constant 0 : i32
    %c0_i32_1 = arith.constant 0 : i32
    return %arg1, %c0_i32, %c0_i32_0 : i32, i32, i32
  }
  func.func @transform_12(%arg0: i32, %arg1: i32) -> (i32, i32, i32) {
    %c0_i32 = arith.constant 0 : i32
    %c0_i32_0 = arith.constant 0 : i32
    %c0_i32_1 = arith.constant 0 : i32
    return %arg1, %c0_i32, %c0_i32_0 : i32, i32, i32
  }
  func.func @transform_13(%arg0: i32, %arg1: i32) -> (i32, i32, i32) {
    %c0_i32 = arith.constant 0 : i32
    %c0_i32_0 = arith.constant 0 : i32
    %c0_i32_1 = arith.constant 0 : i32
    return %arg1, %c0_i32, %c0_i32_0 : i32, i32, i32
  }
  func.func @transform_14(%arg0: i32, %arg1: i32) -> (i32, i32, i32) {
    %c0_i32 = arith.constant 0 : i32
    %c0_i32_0 = arith.constant 0 : i32
    %c0_i32_1 = arith.constant 0 : i32
    return %arg1, %c0_i32, %c0_i32_0 : i32, i32, i32
  }
  func.func @transform_15(%arg0: i32, %arg1: i32) -> (i32, i32) {
    %c0_i32 = arith.constant 0 : i32
    %c0_i32_0 = arith.constant 0 : i32
    %c0_i32_1 = arith.constant 0 : i32
    return %c0_i32, %c0_i32_0 : i32, i32
  }
  func.func @transform_16(%arg0: i32, %arg1: i32) -> (i32, i32) {
    %c0_i32 = arith.constant 0 : i32
    %c0_i32_0 = arith.constant 0 : i32
    %c0_i32_1 = arith.constant 0 : i32
    return %c0_i32, %c0_i32_0 : i32, i32
  }
  func.func @transform_17(%arg0: i32, %arg1: i32) -> (i32, i32) {
    %c0_i32 = arith.constant 0 : i32
    %c0_i32_0 = arith.constant 0 : i32
    %c0_i32_1 = arith.constant 0 : i32
    return %c0_i32, %c0_i32_0 : i32, i32
  }
  func.func @transform_18(%arg0: i32, %arg1: i32) -> (i32, i32) {
    %c0_i32 = arith.constant 0 : i32
    %c0_i32_0 = arith.constant 0 : i32
    %c0_i32_1 = arith.constant 0 : i32
    return %c0_i32, %c0_i32_0 : i32, i32
  }
  func.func @transform_19(%arg0: i32, %arg1: i32) -> (i32, i32, i32) {
    %c0_i32 = arith.constant 0 : i32
    %c0_i32_0 = arith.constant 0 : i32
    %c0_i32_1 = arith.constant 0 : i32
    return %arg0, %c0_i32, %c0_i32_0 : i32, i32, i32
  }
}

</mosaic_0001>

<llo_original>
// kernel: spfm_forward.1
$region0: #{spfm_forward.1}
  #allocation0 [shape = 'u32[]', space=smem, size = 0x4, offset = 0x4, fixed_abs, tag = 'smem constant byte address 0x4 - core index']
  #allocation1 [shape = 'u32[144,128]{1,0:T(1,128)}', space=vmem, size = 0x12000, scoped, tag = 'internal scratch']
  #allocation2 [shape = 'f32[2,512]{1,0:T(2,128)}', space=vmem, size = 0x1000, scoped, tag = 'scratch operand']
  #allocation3 [shape = 'f32[8,512]{1,0:T(8,128)}', space=vmem, size = 0x4000, scoped, tag = 'scratch operand']
  #allocation4 [shape = 'f32[32,256]{1,0:T(8,128)}', space=vmem, size = 0x8000, scoped, tag = 'scratch operand']
  %s0 = inlined_call_operand.vmem [shape: f32[2,2,2,256], index: 0, kind: input, shape index: {}]
  %s1 = inlined_call_operand.vmem [shape: f32[2,8,18], index: 1, kind: input, shape index: {}]
  %s2 = inlined_call_operand.vmem [shape: f32[2,8,1], index: 2, kind: input, shape index: {}]
  %s3 = inlined_call_operand.vmem [shape: f32[2,8,1], index: 3, kind: input, shape index: {}]
  %s4 = inlined_call_operand.vmem [shape: f32[2,8,8], index: 4, kind: input, shape index: {}]
  %s5 = inlined_call_operand.vmem [shape: f32[2,8,1], index: 5, kind: input, shape index: {}]
  %s6 = inlined_call_operand.vmem [shape: f32[2,8,1], index: 6, kind: input, shape index: {}]
  %s7 = inlined_call_operand.vmem [shape: f32[2,8,72], index: 7, kind: input, shape index: {}]
  %s8 = inlined_call_operand.vmem [shape: f32[2,8,1], index: 8, kind: input, shape index: {}]
  %s9 = inlined_call_operand.vmem [shape: f32[2,8,1], index: 9, kind: input, shape index: {}]
  %s10 = inlined_call_operand.vmem [shape: f32[2,8,8], index: 10, kind: input, shape index: {}]
  %s11 = inlined_call_operand.vmem [shape: f32[2,8,1], index: 11, kind: input, shape index: {}]
  %s12 = inlined_call_operand.vmem [shape: f32[2,8,1], index: 12, kind: input, shape index: {}]
  %s13 = inlined_call_operand.vmem [shape: f32[2,8,2], index: 13, kind: input, shape index: {}]
  %s14 = inlined_call_operand.vmem [shape: f32[2,32,8], index: 14, kind: input, shape index: {}]
  %s15 = inlined_call_operand.vmem [shape: f32[32,1], index: 15, kind: input, shape index: {}]
  %s16 = inlined_call_operand.vmem [shape: f32[32,1], index: 16, kind: input, shape index: {}]
  %s17 = inlined_call_operand.vmem [shape: f32[18,256], index: 17, kind: input, shape index: {}]
  %s18 = inlined_call_operand.vmem [shape: f32[72,256], index: 18, kind: input, shape index: {}]
  %s19 = inlined_call_operand.vmem [shape: f32[2,32,256], index: 19, kind: output, shape index: {}]
  %s20 = sld [smem:[#allocation0]]
  $region117: #{spfm_forward.1} parent=0
    _
  %s22 = ssub.s32 1, %s20
  %s23 = scalar_select 0, %s22, %s20
  loop: start=0, step=1, limit=6
  $region2: #{spfm_forward.1} parent=0 // loop_pre_header
    _
  $region3: #{spfm_forward.1} parent=0 // loop_header
    %s25 = sphi 0, %s29
    %p26 = scmp.ge.s32.totalorder %s25, 6
    %s32 = sphi 0, %s44
    %s33 = sphi 0, %s40
    %s34 = sphi 0, %s32
    %s35 = sphi 0, %s33
    %s36 = sphi 0, %s34
    %s37 = sphi 0, %s35
    %s49 = sphi 0, %s51
    %s52 = sphi 0, %s49
    %s53 = sphi 0, %s52
    %s69 = sphi 0, %s53
    %s75 = sphi 0, %s77
    %s78 = sphi 0, %s75
    %s79 = sphi 0, %s78
    %s95 = sphi 0, %s79
    %s101 = sphi 0, %s103
    %s104 = sphi 0, %s101
    %s105 = sphi 0, %s104
    %s121 = sphi 0, %s105
    %s127 = sphi 0, %s129
    %s130 = sphi 0, %s127
    %s131 = sphi 0, %s130
    %s147 = sphi 0, %s131
    %s153 = sphi 0, %s155
    %s156 = sphi 0, %s153
    %s157 = sphi 0, %s156
    %s173 = sphi 0, %s157
    %s179 = sphi 0, %s181
    %s182 = sphi 0, %s179
    %s183 = sphi 0, %s182
    %s199 = sphi 0, %s183
    %s205 = sphi 0, %s207
    %s208 = sphi 0, %s205
    %s209 = sphi 0, %s208
    %s225 = sphi 0, %s209
    %s231 = sphi 0, %s233
    %s234 = sphi 0, %s231
    %s235 = sphi 0, %s234
    %s251 = sphi 0, %s235
    %s257 = sphi 0, %s259
    %s260 = sphi 0, %s257
    %s261 = sphi 0, %s260
    %s277 = sphi 0, %s261
    %s283 = sphi 0, %s285
    %s286 = sphi 0, %s283
    %s287 = sphi 0, %s286
    %s303 = sphi 0, %s287
    %s309 = sphi 0, %s311
    %s312 = sphi 0, %s309
    %s313 = sphi 0, %s312
    %s329 = sphi 0, %s313
    %s335 = sphi 0, %s337
    %s338 = sphi 0, %s335
    %s339 = sphi 0, %s338
    %s355 = sphi 0, %s339
    %s361 = sphi 0, %s363
    %s364 = sphi 0, %s361
    %s365 = sphi 0, %s364
    %s381 = sphi 0, %s365
    %s387 = sphi 0, %s389
    %s390 = sphi 0, %s387
    %s391 = sphi 0, %s390
    %s407 = sphi 0, %s391
    %s413 = sphi 0, %s415
    %s416 = sphi 0, %s413
    %s417 = sphi 0, %s416
    %s433 = sphi 0, %s417
    %s437 = sphi 0, %s437
    %s439 = sphi 0, %s437
    %s440 = sphi 0, %s439
    %s454 = sphi 0, %s440
    %s458 = sphi 0, %s458
    %s460 = sphi 0, %s458
    %s461 = sphi 0, %s460
    %s475 = sphi 0, %s461
    %s479 = sphi 0, %s479
    %s481 = sphi 0, %s479
    %s482 = sphi 0, %s481
    %s496 = sphi 0, %s482
    %s500 = sphi 0, %s500
    %s502 = sphi 0, %s500
    %s503 = sphi 0, %s502
    %s517 = sphi 0, %s503
    %s523 = sphi 0, %s525
    %s526 = sphi 0, %s523
    %s527 = sphi 0, %s526
    %s543 = sphi 0, %s527
  $region4: #{spfm_forward.1} parent=0 // loop_header_branch
    %28 = sbr.rel (%p26) target = $region8
  $region5: #{spfm_forward.1} parent=0 // loop_body
    %s30 = ssub.s32 %s25, 1
    %s31 = ssub.s32 %s25, 2
    %s38 = sadd.s32 1, %s33
    %p39 = scmp.ge.s32.totalorder %s38, 2
    %s40 = scalar_select %p39, 0, %s38
    %s41 = sadd.s32 1, %s32
    %s42 = scalar_select %p39, %s41, %s32
    %p43 = scmp.ge.s32.totalorder %s42, 2
    %s44 = scalar_select %p43, 0, %s42
    %s45 = ssub.s32 %s32, %s44
    %s46 = ssub.s32 %s33, %s40
    %s47 = sor.u32 %s45, %s46
    %p48 = scmp.eq.s32.totalorder %s47, 0
    %s50 = sadd.s32 %s49, 1
    %s51 = scalar_select %p48, %s49, %s50
    %p54 = pneg %p48
    %p55 = scmp.eq.s32.totalorder %s25, 3
    %p56 = por %p54, %p55
    %p57 = scmp.ne.s32.totalorder %s49, %s52
    %p58 = scmp.eq.s32.totalorder %s25, 0
    %p59 = por %p57, %p58
    %p60 = scmp.ne.s32.totalorder %s49, %s52
    %p61 = scmp.eq.s32.totalorder %s30, 3
    %p62 = por %p60, %p61
    %p63 = scmp.ne.s32.totalorder %s52, %s53
    %p64 = scmp.eq.s32.totalorder %s30, 0
    %p65 = por %p63, %p64
    %p66 = scmp.ne.s32.totalorder %s52, %s53
    %p67 = scmp.eq.s32.totalorder %s31, 3
    %p68 = por %p66, %p67
    %p70 = scmp.ne.s32.totalorder %s53, %s69
    %p71 = scmp.eq.s32.totalorder %s31, 0
    %p72 = por %p70, %p71
    %s73 = ssub.s32 %s33, %s40
    %p74 = scmp.eq.s32.totalorder %s73, 0
    %s76 = sadd.s32 %s75, 1
    %s77 = scalar_select %p74, %s75, %s76
    %p80 = pneg %p74
    %p81 = scmp.eq.s32.totalorder %s25, 3
    %p82 = por %p80, %p81
    %p83 = scmp.ne.s32.totalorder %s75, %s78
    %p84 = scmp.eq.s32.totalorder %s25, 0
    %p85 = por %p83, %p84
    %p86 = scmp.ne.s32.totalorder %s75, %s78
    %p87 = scmp.eq.s32.totalorder %s30, 3
    %p88 = por %p86, %p87
    %p89 = scmp.ne.s32.totalorder %s78, %s79
    %p90 = scmp.eq.s32.totalorder %s30, 0
    %p91 = por %p89, %p90
    %p92 = scmp.ne.s32.totalorder %s78, %s79
    %p93 = scmp.eq.s32.totalorder %s31, 3
    %p94 = por %p92, %p93
    %p96 = scmp.ne.s32.totalorder %s79, %s95
    %p97 = scmp.eq.s32.totalorder %s31, 0
    %p98 = por %p96, %p97
    %s99 = ssub.s32 %s33, %s40
    %p100 = scmp.eq.s32.totalorder %s99, 0
    %s102 = sadd.s32 %s101, 1
    %s103 = scalar_select %p100, %s101, %s102
    %p106 = pneg %p100
    %p107 = scmp.eq.s32.totalorder %s25, 3
    %p108 = por %p106, %p107
    %p109 = scmp.ne.s32.totalorder %s101, %s104
    %p110 = scmp.eq.s32.totalorder %s25, 0
    %p111 = por %p109, %p110
    %p112 = scmp.ne.s32.totalorder %s101, %s104
    %p113 = scmp.eq.s32.totalorder %s30, 3
    %p114 = por %p112, %p113
    %p115 = scmp.ne.s32.totalorder %s104, %s105
    %p116 = scmp.eq.s32.totalorder %s30, 0
    %p117 = por %p115, %p116
    %p118 = scmp.ne.s32.totalorder %s104, %s105
    %p119 = scmp.eq.s32.totalorder %s31, 3
    %p120 = por %p118, %p119
    %p122 = scmp.ne.s32.totalorder %s105, %s121
    %p123 = scmp.eq.s32.totalorder %s31, 0
    %p124 = por %p122, %p123
    %s125 = ssub.s32 %s33, %s40
    %p126 = scmp.eq.s32.totalorder %s125, 0
    %s128 = sadd.s32 %s127, 1
    %s129 = scalar_select %p126, %s127, %s128
    %p132 = pneg %p126
    %p133 = scmp.eq.s32.totalorder %s25, 3
    %p134 = por %p132, %p133
    %p135 = scmp.ne.s32.totalorder %s127, %s130
    %p136 = scmp.eq.s32.totalorder %s25, 0
    %p137 = por %p135, %p136
    %p138 = scmp.ne.s32.totalorder %s127, %s130
    %p139 = scmp.eq.s32.totalorder %s30, 3
    %p140 = por %p138, %p139
    %p141 = scmp.ne.s32.totalorder %s130, %s131
    %p142 = scmp.eq.s32.totalorder %s30, 0
    %p143 = por %p141, %p142
    %p144 = scmp.ne.s32.totalorder %s130, %s131
    %p145 = scmp.eq.s32.totalorder %s31, 3
    %p146 = por %p144, %p145
    %p148 = scmp.ne.s32.totalorder %s131, %s147
    %p149 = scmp.eq.s32.totalorder %s31, 0
    %p150 = por %p148, %p149
    %s151 = ssub.s32 %s33, %s40
    %p152 = scmp.eq.s32.totalorder %s151, 0
    %s154 = sadd.s32 %s153, 1
    %s155 = scalar_select %p152, %s153, %s154
    %p158 = pneg %p152
    %p159 = scmp.eq.s32.totalorder %s25, 3
    %p160 = por %p158, %p159
    %p161 = scmp.ne.s32.totalorder %s153, %s156
    %p162 = scmp.eq.s32.totalorder %s25, 0
    %p163 = por %p161, %p162
    %p164 = scmp.ne.s32.totalorder %s153, %s156
    %p165 = scmp.eq.s32.totalorder %s30, 3
    %p166 = por %p164, %p165
    %p167 = scmp.ne.s32.totalorder %s156, %s157
    %p168 = scmp.eq.s32.totalorder %s30, 0
    %p169 = por %p167, %p168
    %p170 = scmp.ne.s32.totalorder %s156, %s157
    %p171 = scmp.eq.s32.totalorder %s31, 3
    %p172 = por %p170, %p171
    %p174 = scmp.ne.s32.totalorder %s157, %s173
    %p175 = scmp.eq.s32.totalorder %s31, 0
    %p176 = por %p174, %p175
    %s177 = ssub.s32 %s33, %s40
    %p178 = scmp.eq.s32.totalorder %s177, 0
    %s180 = sadd.s32 %s179, 1
    %s181 = scalar_select %p178, %s179, %s180
    %p184 = pneg %p178
    %p185 = scmp.eq.s32.totalorder %s25, 3
    %p186 = por %p184, %p185
    %p187 = scmp.ne.s32.totalorder %s179, %s182
    %p188 = scmp.eq.s32.totalorder %s25, 0
    %p189 = por %p187, %p188
    %p190 = scmp.ne.s32.totalorder %s179, %s182
    %p191 = scmp.eq.s32.totalorder %s30, 3
    %p192 = por %p190, %p191
    %p193 = scmp.ne.s32.totalorder %s182, %s183
    %p194 = scmp.eq.s32.totalorder %s30, 0
    %p195 = por %p193, %p194
    %p196 = scmp.ne.s32.totalorder %s182, %s183
    %p197 = scmp.eq.s32.totalorder %s31, 3
    %p198 = por %p196, %p197
    %p200 = scmp.ne.s32.totalorder %s183, %s199
    %p201 = scmp.eq.s32.totalorder %s31, 0
    %p202 = por %p200, %p201
    %s203 = ssub.s32 %s33, %s40
    %p204 = scmp.eq.s32.totalorder %s203, 0
    %s206 = sadd.s32 %s205, 1
    %s207 = scalar_select %p204, %s205, %s206
    %p210 = pneg %p204
    %p211 = scmp.eq.s32.totalorder %s25, 3
    %p212 = por %p210, %p211
    %p213 = scmp.ne.s32.totalorder %s205, %s208
    %p214 = scmp.eq.s32.totalorder %s25, 0
    %p215 = por %p213, %p214
    %p216 = scmp.ne.s32.totalorder %s205, %s208
    %p217 = scmp.eq.s32.totalorder %s30, 3
    %p218 = por %p216, %p217
    %p219 = scmp.ne.s32.totalorder %s208, %s209
    %p220 = scmp.eq.s32.totalorder %s30, 0
    %p221 = por %p219, %p220
    %p222 = scmp.ne.s32.totalorder %s208, %s209
    %p223 = scmp.eq.s32.totalorder %s31, 3
    %p224 = por %p222, %p223
    %p226 = scmp.ne.s32.totalorder %s209, %s225
    %p227 = scmp.eq.s32.totalorder %s31, 0
    %p228 = por %p226, %p227
    %s229 = ssub.s32 %s33, %s40
    %p230 = scmp.eq.s32.totalorder %s229, 0
    %s232 = sadd.s32 %s231, 1
    %s233 = scalar_select %p230, %s231, %s232
    %p236 = pneg %p230
    %p237 = scmp.eq.s32.totalorder %s25, 3
    %p238 = por %p236, %p237
    %p239 = scmp.ne.s32.totalorder %s231, %s234
    %p240 = scmp.eq.s32.totalorder %s25, 0
    %p241 = por %p239, %p240
    %p242 = scmp.ne.s32.totalorder %s231, %s234
    %p243 = scmp.eq.s32.totalorder %s30, 3
    %p244 = por %p242, %p243
    %p245 = scmp.ne.s32.totalorder %s234, %s235
    %p246 = scmp.eq.s32.totalorder %s30, 0
    %p247 = por %p245, %p246
    %p248 = scmp.ne.s32.totalorder %s234, %s235
    %p249 = scmp.eq.s32.totalorder %s31, 3
    %p250 = por %p248, %p249
    %p252 = scmp.ne.s32.totalorder %s235, %s251
    %p253 = scmp.eq.s32.totalorder %s31, 0
    %p254 = por %p252, %p253
    %s255 = ssub.s32 %s33, %s40
    %p256 = scmp.eq.s32.totalorder %s255, 0
    %s258 = sadd.s32 %s257, 1
    %s259 = scalar_select %p256, %s257, %s258
    %p262 = pneg %p256
    %p263 = scmp.eq.s32.totalorder %s25, 3
    %p264 = por %p262, %p263
    %p265 = scmp.ne.s32.totalorder %s257, %s260
    %p266 = scmp.eq.s32.totalorder %s25, 0
    %p267 = por %p265, %p266
    %p268 = scmp.ne.s32.totalorder %s257, %s260
    %p269 = scmp.eq.s32.totalorder %s30, 3
    %p270 = por %p268, %p269
    %p271 = scmp.ne.s32.totalorder %s260, %s261
    %p272 = scmp.eq.s32.totalorder %s30, 0
    %p273 = por %p271, %p272
    %p274 = scmp.ne.s32.totalorder %s260, %s261
    %p275 = scmp.eq.s32.totalorder %s31, 3
    %p276 = por %p274, %p275
    %p278 = scmp.ne.s32.totalorder %s261, %s277
    %p279 = scmp.eq.s32.totalorder %s31, 0
    %p280 = por %p278, %p279
    %s281 = ssub.s32 %s33, %s40
    %p282 = scmp.eq.s32.totalorder %s281, 0
    %s284 = sadd.s32 %s283, 1
    %s285 = scalar_select %p282, %s283, %s284
    %p288 = pneg %p282
    %p289 = scmp.eq.s32.totalorder %s25, 3
    %p290 = por %p288, %p289
    %p291 = scmp.ne.s32.totalorder %s283, %s286
    %p292 = scmp.eq.s32.totalorder %s25, 0
    %p293 = por %p291, %p292
    %p294 = scmp.ne.s32.totalorder %s283, %s286
    %p295 = scmp.eq.s32.totalorder %s30, 3
    %p296 = por %p294, %p295
    %p297 = scmp.ne.s32.totalorder %s286, %s287
    %p298 = scmp.eq.s32.totalorder %s30, 0
    %p299 = por %p297, %p298
    %p300 = scmp.ne.s32.totalorder %s286, %s287
    %p301 = scmp.eq.s32.totalorder %s31, 3
    %p302 = por %p300, %p301
    %p304 = scmp.ne.s32.totalorder %s287, %s303
    %p305 = scmp.eq.s32.totalorder %s31, 0
    %p306 = por %p304, %p305
    %s307 = ssub.s32 %s33, %s40
    %p308 = scmp.eq.s32.totalorder %s307, 0
    %s310 = sadd.s32 %s309, 1
    %s311 = scalar_select %p308, %s309, %s310
    %p314 = pneg %p308
    %p315 = scmp.eq.s32.totalorder %s25, 3
    %p316 = por %p314, %p315
    %p317 = scmp.ne.s32.totalorder %s309, %s312
    %p318 = scmp.eq.s32.totalorder %s25, 0
    %p319 = por %p317, %p318
    %p320 = scmp.ne.s32.totalorder %s309, %s312
    %p321 = scmp.eq.s32.totalorder %s30, 3
    %p322 = por %p320, %p321
    %p323 = scmp.ne.s32.totalorder %s312, %s313
    %p324 = scmp.eq.s32.totalorder %s30, 0
    %p325 = por %p323, %p324
    %p326 = scmp.ne.s32.totalorder %s312, %s313
    %p327 = scmp.eq.s32.totalorder %s31, 3
    %p328 = por %p326, %p327
    %p330 = scmp.ne.s32.totalorder %s313, %s329
    %p331 = scmp.eq.s32.totalorder %s31, 0
    %p332 = por %p330, %p331
    %s333 = ssub.s32 %s33, %s40
    %p334 = scmp.eq.s32.totalorder %s333, 0
    %s336 = sadd.s32 %s335, 1
    %s337 = scalar_select %p334, %s335, %s336
    %p340 = pneg %p334
    %p341 = scmp.eq.s32.totalorder %s25, 3
    %p342 = por %p340, %p341
    %p343 = scmp.ne.s32.totalorder %s335, %s338
    %p344 = scmp.eq.s32.totalorder %s25, 0
    %p345 = por %p343, %p344
    %p346 = scmp.ne.s32.totalorder %s335, %s338
    %p347 = scmp.eq.s32.totalorder %s30, 3
    %p348 = por %p346, %p347
    %p349 = scmp.ne.s32.totalorder %s338, %s339
    %p350 = scmp.eq.s32.totalorder %s30, 0
    %p351 = por %p349, %p350
    %p352 = scmp.ne.s32.totalorder %s338, %s339
    %p353 = scmp.eq.s32.totalorder %s31, 3
    %p354 = por %p352, %p353
    %p356 = scmp.ne.s32.totalorder %s339, %s355
    %p357 = scmp.eq.s32.totalorder %s31, 0
    %p358 = por %p356, %p357
    %s359 = ssub.s32 %s33, %s40
    %p360 = scmp.eq.s32.totalorder %s359, 0
    %s362 = sadd.s32 %s361, 1
    %s363 = scalar_select %p360, %s361, %s362
    %p366 = pneg %p360
    %p367 = scmp.eq.s32.totalorder %s25, 3
    %p368 = por %p366, %p367
    %p369 = scmp.ne.s32.totalorder %s361, %s364
    %p370 = scmp.eq.s32.totalorder %s25, 0
    %p371 = por %p369, %p370
    %p372 = scmp.ne.s32.totalorder %s361, %s364
    %p373 = scmp.eq.s32.totalorder %s30, 3
    %p374 = por %p372, %p373
    %p375 = scmp.ne.s32.totalorder %s364, %s365
    %p376 = scmp.eq.s32.totalorder %s30, 0
    %p377 = por %p375, %p376
    %p378 = scmp.ne.s32.totalorder %s364, %s365
    %p379 = scmp.eq.s32.totalorder %s31, 3
    %p380 = por %p378, %p379
    %p382 = scmp.ne.s32.totalorder %s365, %s381
    %p383 = scmp.eq.s32.totalorder %s31, 0
    %p384 = por %p382, %p383
    %s385 = ssub.s32 %s33, %s40
    %p386 = scmp.eq.s32.totalorder %s385, 0
    %s388 = sadd.s32 %s387, 1
    %s389 = scalar_select %p386, %s387, %s388
    %p392 = pneg %p386
    %p393 = scmp.eq.s32.totalorder %s25, 3
    %p394 = por %p392, %p393
    %p395 = scmp.ne.s32.totalorder %s387, %s390
    %p396 = scmp.eq.s32.totalorder %s25, 0
    %p397 = por %p395, %p396
    %p398 = scmp.ne.s32.totalorder %s387, %s390
    %p399 = scmp.eq.s32.totalorder %s30, 3
    %p400 = por %p398, %p399
    %p401 = scmp.ne.s32.totalorder %s390, %s391
    %p402 = scmp.eq.s32.totalorder %s30, 0
    %p403 = por %p401, %p402
    %p404 = scmp.ne.s32.totalorder %s390, %s391
    %p405 = scmp.eq.s32.totalorder %s31, 3
    %p406 = por %p404, %p405
    %p408 = scmp.ne.s32.totalorder %s391, %s407
    %p409 = scmp.eq.s32.totalorder %s31, 0
    %p410 = por %p408, %p409
    %s411 = ssub.s32 %s33, %s40
    %p412 = scmp.eq.s32.totalorder %s411, 0
    %s414 = sadd.s32 %s413, 1
    %s415 = scalar_select %p412, %s413, %s414
    %p418 = pneg %p412
    %p419 = scmp.eq.s32.totalorder %s25, 3
    %p420 = por %p418, %p419
    %p421 = scmp.ne.s32.totalorder %s413, %s416
    %p422 = scmp.eq.s32.totalorder %s25, 0
    %p423 = por %p421, %p422
    %p424 = scmp.ne.s32.totalorder %s413, %s416
    %p425 = scmp.eq.s32.totalorder %s30, 3
    %p426 = por %p424, %p425
    %p427 = scmp.ne.s32.totalorder %s416, %s417
    %p428 = scmp.eq.s32.totalorder %s30, 0
    %p429 = por %p427, %p428
    %p430 = scmp.ne.s32.totalorder %s416, %s417
    %p431 = scmp.eq.s32.totalorder %s31, 3
    %p432 = por %p430, %p431
    %p434 = scmp.ne.s32.totalorder %s417, %s433
    %p435 = scmp.eq.s32.totalorder %s31, 0
    %p436 = por %p434, %p435
    %s438 = sadd.s32 %s437, 1
    %p441 = scmp.eq.s32.totalorder %s25, 3
    %p442 = scmp.ne.s32.totalorder %s437, %s439
    %p443 = scmp.eq.s32.totalorder %s25, 0
    %p444 = por %p442, %p443
    %p445 = scmp.ne.s32.totalorder %s437, %s439
    %p446 = scmp.eq.s32.totalorder %s30, 3
    %p447 = por %p445, %p446
    %p448 = scmp.ne.s32.totalorder %s439, %s440
    %p449 = scmp.eq.s32.totalorder %s30, 0
    %p450 = por %p448, %p449
    %p451 = scmp.ne.s32.totalorder %s439, %s440
    %p452 = scmp.eq.s32.totalorder %s31, 3
    %p453 = por %p451, %p452
    %p455 = scmp.ne.s32.totalorder %s440, %s454
    %p456 = scmp.eq.s32.totalorder %s31, 0
    %p457 = por %p455, %p456
    %s459 = sadd.s32 %s458, 1
    %p462 = scmp.eq.s32.totalorder %s25, 3
    %p463 = scmp.ne.s32.totalorder %s458, %s460
    %p464 = scmp.eq.s32.totalorder %s25, 0
    %p465 = por %p463, %p464
    %p466 = scmp.ne.s32.totalorder %s458, %s460
    %p467 = scmp.eq.s32.totalorder %s30, 3
    %p468 = por %p466, %p467
    %p469 = scmp.ne.s32.totalorder %s460, %s461
    %p470 = scmp.eq.s32.totalorder %s30, 0
    %p471 = por %p469, %p470
    %p472 = scmp.ne.s32.totalorder %s460, %s461
    %p473 = scmp.eq.s32.totalorder %s31, 3
    %p474 = por %p472, %p473
    %p476 = scmp.ne.s32.totalorder %s461, %s475
    %p477 = scmp.eq.s32.totalorder %s31, 0
    %p478 = por %p476, %p477
    %s480 = sadd.s32 %s479, 1
    %p483 = scmp.eq.s32.totalorder %s25, 3
    %p484 = scmp.ne.s32.totalorder %s479, %s481
    %p485 = scmp.eq.s32.totalorder %s25, 0
    %p486 = por %p484, %p485
    %p487 = scmp.ne.s32.totalorder %s479, %s481
    %p488 = scmp.eq.s32.totalorder %s30, 3
    %p489 = por %p487, %p488
    %p490 = scmp.ne.s32.totalorder %s481, %s482
    %p491 = scmp.eq.s32.totalorder %s30, 0
    %p492 = por %p490, %p491
    %p493 = scmp.ne.s32.totalorder %s481, %s482
    %p494 = scmp.eq.s32.totalorder %s31, 3
    %p495 = por %p493, %p494
    %p497 = scmp.ne.s32.totalorder %s482, %s496
    %p498 = scmp.eq.s32.totalorder %s31, 0
    %p499 = por %p497, %p498
    %s501 = sadd.s32 %s500, 1
    %p504 = scmp.eq.s32.totalorder %s25, 3
    %p505 = scmp.ne.s32.totalorder %s500, %s502
    %p506 = scmp.eq.s32.totalorder %s25, 0
    %p507 = por %p505, %p506
    %p508 = scmp.ne.s32.totalorder %s500, %s502
    %p509 = scmp.eq.s32.totalorder %s30, 3
    %p510 = por %p508, %p509
    %p511 = scmp.ne.s32.totalorder %s502, %s503
    %p512 = scmp.eq.s32.totalorder %s30, 0
    %p513 = por %p511, %p512
    %p514 = scmp.ne.s32.totalorder %s502, %s503
    %p515 = scmp.eq.s32.totalorder %s31, 3
    %p516 = por %p514, %p515
    %p518 = scmp.ne.s32.totalorder %s503, %s517
    %p519 = scmp.eq.s32.totalorder %s31, 0
    %p520 = por %p518, %p519
    %s521 = ssub.s32 %s32, %s44
    %p522 = scmp.eq.s32.totalorder %s521, 0
    %s524 = sadd.s32 %s523, 1
    %s525 = scalar_select %p522, %s523, %s524
    %p528 = pneg %p522
    %p529 = scmp.eq.s32.totalorder %s25, 3
    %p530 = por %p528, %p529
    %p531 = scmp.ne.s32.totalorder %s523, %s526
    %p532 = scmp.eq.s32.totalorder %s25, 0
    %p533 = por %p531, %p532
    %p534 = scmp.ne.s32.totalorder %s523, %s526
    %p535 = scmp.eq.s32.totalorder %s30, 3
    %p536 = por %p534, %p535
    %p537 = scmp.ne.s32.totalorder %s526, %s527
    %p538 = scmp.eq.s32.totalorder %s30, 0
    %p539 = por %p537, %p538
    %p540 = scmp.ne.s32.totalorder %s526, %s527
    %p541 = scmp.eq.s32.totalorder %s31, 3
    %p542 = por %p540, %p541
    %p544 = scmp.ne.s32.totalorder %s527, %s543
    %p545 = scmp.eq.s32.totalorder %s31, 0
    %p546 = por %p544, %p545
    %p547 = scmp.le.s32.totalorder 1, %s25
    %p548 = scmp.lt.s32.totalorder %s25, 5
    %p549 = pnand %p547, %p548
    %p550 = pneg %p549
    // Predicated region
    $region9: #{spfm_forward.1} parent=5 // pred_check
      _
    $region10: #{spfm_forward.1} parent=5 // pred_check_branch
      %552 = sbr.rel (%p549) target = $region12
    $region11: #{spfm_forward.1} parent=5 // pred_region
      %s553 = ssub.s32 %s25, 1
      // Predicated region
      $region13: #{spfm_forward.1} parent=11 // pred_check
        %p554 = pneg %p450
      $region14: #{spfm_forward.1} parent=11 // pred_check_branch
        %556 = sbr.rel (%p554) target = $region16
      $region15: #{spfm_forward.1} parent=11 // pred_region
        _
      $region16: #{spfm_forward.1} parent=11 // pred_fallthru
        _
      // Predicated region
      $region17: #{spfm_forward.1} parent=11 // pred_check
        %p557 = pneg %p471
      $region18: #{spfm_forward.1} parent=11 // pred_check_branch
        %559 = sbr.rel (%p557) target = $region20
      $region19: #{spfm_forward.1} parent=11 // pred_region
        _
      $region20: #{spfm_forward.1} parent=11 // pred_fallthru
        _
      // Predicated region
      $region21: #{spfm_forward.1} parent=11 // pred_check
        %p560 = pneg %p492
      $region22: #{spfm_forward.1} parent=11 // pred_check_branch
        %562 = sbr.rel (%p560) target = $region24
      $region23: #{spfm_forward.1} parent=11 // pred_region
        _
      $region24: #{spfm_forward.1} parent=11 // pred_fallthru
        _
      // Predicated region
      $region25: #{spfm_forward.1} parent=11 // pred_check
        %p563 = pneg %p513
      $region26: #{spfm_forward.1} parent=11 // pred_check_branch
        %565 = sbr.rel (%p563) target = $region28
      $region27: #{spfm_forward.1} parent=11 // pred_region
        _
      $region28: #{spfm_forward.1} parent=11 // pred_fallthru
        _
    $region12: #{spfm_forward.1} parent=5 // pred_fallthru
      _
    %p566 = scmp.lt.s32.totalorder %s25, 4
    // Predicated region
    $region29: #{spfm_forward.1} parent=5 // pred_check
      %p567 = pneg %p566
    $region30: #{spfm_forward.1} parent=5 // pred_check_branch
      %569 = sbr.rel (%p567) target = $region32
    $region31: #{spfm_forward.1} parent=5 // pred_region
      // Predicated region
      $region33: #{spfm_forward.1} parent=31 // pred_check
        %p570 = pneg %p59
      $region34: #{spfm_forward.1} parent=31 // pred_check_branch
        %572 = sbr.rel (%p570) target = $region36
      $region35: #{spfm_forward.1} parent=31 // pred_region
        %p573 = scmp.lt.s32.totalorder %s32, 1
        %s574 = scalar_select %p573, %s32, 1
        %p575 = scmp.lt.s32.totalorder %s33, 1
        %s576 = scalar_select %p575, %s33, 1
        %s577 = smul.addr %s576, 2
        %s578 = smul.addr %s574, 4
        %s579 = sadd.s32 %s577, %s578
        %s580 = smul.addr %s579, 2
        %s581 = scalar_lea.vmem %s0, %s580
      $region36: #{spfm_forward.1} parent=31 // pred_fallthru
        _
      // Predicated region
      $region37: #{spfm_forward.1} parent=31 // pred_check
        %p582 = pneg %p85
      $region38: #{spfm_forward.1} parent=31 // pred_check_branch
        %584 = sbr.rel (%p582) target = $region40
      $region39: #{spfm_forward.1} parent=31 // pred_region
        %p585 = scmp.lt.s32.totalorder %s33, 1
        %s586 = scalar_select %p585, %s33, 1
        %s587 = smul.addr %s586, 8
        %s588 = scalar_lea.vmem %s1, %s587
      $region40: #{spfm_forward.1} parent=31 // pred_fallthru
        _
      // Predicated region
      $region41: #{spfm_forward.1} parent=31 // pred_check
        %p589 = pneg %p111
      $region42: #{spfm_forward.1} parent=31 // pred_check_branch
        %591 = sbr.rel (%p589) target = $region44
      $region43: #{spfm_forward.1} parent=31 // pred_region
        %p592 = scmp.lt.s32.totalorder %s33, 1
        %s593 = scalar_select %p592, %s33, 1
        %s594 = smul.addr %s593, 8
        %s595 = scalar_lea.vmem %s2, %s594
      $region44: #{spfm_forward.1} parent=31 // pred_fallthru
        _
      // Predicated region
      $region45: #{spfm_forward.1} parent=31 // pred_check
        %p596 = pneg %p137
      $region46: #{spfm_forward.1} parent=31 // pred_check_branch
        %598 = sbr.rel (%p596) target = $region48
      $region47: #{spfm_forward.1} parent=31 // pred_region
        %p599 = scmp.lt.s32.totalorder %s33, 1
        %s600 = scalar_select %p599, %s33, 1
        %s601 = smul.addr %s600, 8
        %s602 = scalar_lea.vmem %s3, %s601
      $region48: #{spfm_forward.1} parent=31 // pred_fallthru
        _
      // Predicated region
      $region49: #{spfm_forward.1} parent=31 // pred_check
        %p603 = pneg %p163
      $region50: #{spfm_forward.1} parent=31 // pred_check_branch
        %605 = sbr.rel (%p603) target = $region52
      $region51: #{spfm_forward.1} parent=31 // pred_region
        %p606 = scmp.lt.s32.totalorder %s33, 1
        %s607 = scalar_select %p606, %s33, 1
        %s608 = smul.addr %s607, 8
        %s609 = scalar_lea.vmem %s4, %s608
      $region52: #{spfm_forward.1} parent=31 // pred_fallthru
        _
      // Predicated region
      $region53: #{spfm_forward.1} parent=31 // pred_check
        %p610 = pneg %p189
      $region54: #{spfm_forward.1} parent=31 // pred_check_branch
        %612 = sbr.rel (%p610) target = $region56
      $region55: #{spfm_forward.1} parent=31 // pred_region
        %p613 = scmp.lt.s32.totalorder %s33, 1
        %s614 = scalar_select %p613, %s33, 1
        %s615 = smul.addr %s614, 8
        %s616 = scalar_lea.vmem %s5, %s615
      $region56: #{spfm_forward.1} parent=31 // pred_fallthru
        _
      // Predicated region
      $region57: #{spfm_forward.1} parent=31 // pred_check
        %p617 = pneg %p215
      $region58: #{spfm_forward.1} parent=31 // pred_check_branch
        %619 = sbr.rel (%p617) target = $region60
      $region59: #{spfm_forward.1} parent=31 // pred_region
        %p620 = scmp.lt.s32.totalorder %s33, 1
        %s621 = scalar_select %p620, %s33, 1
        %s622 = smul.addr %s621, 8
        %s623 = scalar_lea.vmem %s6, %s622
      $region60: #{spfm_forward.1} parent=31 // pred_fallthru
        _
      // Predicated region
      $region61: #{spfm_forward.1} parent=31 // pred_check
        %p624 = pneg %p241
      $region62: #{spfm_forward.1} parent=31 // pred_check_branch
        %626 = sbr.rel (%p624) target = $region64
      $region63: #{spfm_forward.1} parent=31 // pred_region
        %p627 = scmp.lt.s32.totalorder %s33, 1
        %s628 = scalar_select %p627, %s33, 1
        %s629 = smul.addr %s628, 8
        %s630 = scalar_lea.vmem %s7, %s629
      $region64: #{spfm_forward.1} parent=31 // pred_fallthru
        _
      // Predicated region
      $region65: #{spfm_forward.1} parent=31 // pred_check
        %p631 = pneg %p267
      $region66: #{spfm_forward.1} parent=31 // pred_check_branch
        %633 = sbr.rel (%p631) target = $region68
      $region67: #{spfm_forward.1} parent=31 // pred_region
        %p634 = scmp.lt.s32.totalorder %s33, 1
        %s635 = scalar_select %p634, %s33, 1
        %s636 = smul.addr %s635, 8
        %s637 = scalar_lea.vmem %s8, %s636
      $region68: #{spfm_forward.1} parent=31 // pred_fallthru
        _
      // Predicated region
      $region69: #{spfm_forward.1} parent=31 // pred_check
        %p638 = pneg %p293
      $region70: #{spfm_forward.1} parent=31 // pred_check_branch
        %640 = sbr.rel (%p638) target = $region72
      $region71: #{spfm_forward.1} parent=31 // pred_region
        %p641 = scmp.lt.s32.totalorder %s33, 1
        %s642 = scalar_select %p641, %s33, 1
        %s643 = smul.addr %s642, 8
        %s644 = scalar_lea.vmem %s9, %s643
      $region72: #{spfm_forward.1} parent=31 // pred_fallthru
        _
      // Predicated region
      $region73: #{spfm_forward.1} parent=31 // pred_check
        %p645 = pneg %p319
      $region74: #{spfm_forward.1} parent=31 // pred_check_branch
        %647 = sbr.rel (%p645) target = $region76
      $region75: #{spfm_forward.1} parent=31 // pred_region
        %p648 = scmp.lt.s32.totalorder %s33, 1
        %s649 = scalar_select %p648, %s33, 1
        %s650 = smul.addr %s649, 8
        %s651 = scalar_lea.vmem %s10, %s650
      $region76: #{spfm_forward.1} parent=31 // pred_fallthru
        _
      // Predicated region
      $region77: #{spfm_forward.1} parent=31 // pred_check
        %p652 = pneg %p345
      $region78: #{spfm_forward.1} parent=31 // pred_check_branch
        %654 = sbr.rel (%p652) target = $region80
      $region79: #{spfm_forward.1} parent=31 // pred_region
        %p655 = scmp.lt.s32.totalorder %s33, 1
        %s656 = scalar_select %p655, %s33, 1
        %s657 = smul.addr %s656, 8
        %s658 = scalar_lea.vmem %s11, %s657
      $region80: #{spfm_forward.1} parent=31 // pred_fallthru
        _
      // Predicated region
      $region81: #{spfm_forward.1} parent=31 // pred_check
        %p659 = pneg %p371
      $region82: #{spfm_forward.1} parent=31 // pred_check_branch
        %661 = sbr.rel (%p659) target = $region84
      $region83: #{spfm_forward.1} parent=31 // pred_region
        %p662 = scmp.lt.s32.totalorder %s33, 1
        %s663 = scalar_select %p662, %s33, 1
        %s664 = smul.addr %s663, 8
        %s665 = scalar_lea.vmem %s12, %s664
      $region84: #{spfm_forward.1} parent=31 // pred_fallthru
        _
      // Predicated region
      $region85: #{spfm_forward.1} parent=31 // pred_check
        %p666 = pneg %p397
      $region86: #{spfm_forward.1} parent=31 // pred_check_branch
        %668 = sbr.rel (%p666) target = $region88
      $region87: #{spfm_forward.1} parent=31 // pred_region
        %p669 = scmp.lt.s32.totalorder %s33, 1
        %s670 = scalar_select %p669, %s33, 1
        %s671 = smul.addr %s670, 8
        %s672 = scalar_lea.vmem %s13, %s671
      $region88: #{spfm_forward.1} parent=31 // pred_fallthru
        _
      // Predicated region
      $region89: #{spfm_forward.1} parent=31 // pred_check
        %p673 = pneg %p423
      $region90: #{spfm_forward.1} parent=31 // pred_check_branch
        %675 = sbr.rel (%p673) target = $region92
      $region91: #{spfm_forward.1} parent=31 // pred_region
        %p676 = scmp.lt.s32.totalorder %s33, 1
        %s677 = scalar_select %p676, %s33, 1
        %s678 = smul.addr %s677, 4
        %s679 = smul.addr %s678, 8
        %s680 = scalar_lea.vmem %s14, %s679
      $region92: #{spfm_forward.1} parent=31 // pred_fallthru
        _
    $region32: #{spfm_forward.1} parent=5 // pred_fallthru
      _
    %p681 = scmp.le.s32.totalorder 1, %s25
    %p682 = scmp.lt.s32.totalorder %s25, 5
    %p683 = pnand %p681, %p682
    %p684 = pneg %p683
    // Predicated region
    $region93: #{spfm_forward.1} parent=5 // pred_check
      _
    $region94: #{spfm_forward.1} parent=5 // pred_check_branch
      %686 = sbr.rel (%p683) target = $region96
    $region95: #{spfm_forward.1} parent=5 // pred_region
      %s687 = ssub.s32 %s25, 1
      %p688 = scmp.lt.s32.totalorder %s34, 1
      %s689 = scalar_select %p688, %s34, 1
      %p690 = scmp.lt.s32.totalorder %s35, 1
      %s691 = scalar_select %p690, %s35, 1
      %s692 = smul.addr %s691, 2
      %s693 = smul.addr %s689, 4
      %s694 = sadd.s32 %s692, %s693
      %s695 = smul.addr %s694, 2
      %s696 = scalar_lea.vmem %s0, %s695
      %p697 = pneg %p65
      %p698 = pneg %p62
      %p699 = scmp.lt.s32.totalorder %s35, 1
      %s700 = scalar_select %p699, %s35, 1
      %s701 = smul.addr %s700, 8
      %s702 = scalar_lea.vmem %s1, %s701
      %p703 = pneg %p91
      %p704 = pneg %p88
      %p705 = scmp.lt.s32.totalorder %s35, 1
      %s706 = scalar_select %p705, %s35, 1
      %s707 = smul.addr %s706, 8
      %s708 = scalar_lea.vmem %s2, %s707
      %p709 = pneg %p117
      %p710 = pneg %p114
      %p711 = scmp.lt.s32.totalorder %s35, 1
      %s712 = scalar_select %p711, %s35, 1
      %s713 = smul.addr %s712, 8
      %s714 = scalar_lea.vmem %s3, %s713
      %p715 = pneg %p143
      %p716 = pneg %p140
      %p717 = scmp.lt.s32.totalorder %s35, 1
      %s718 = scalar_select %p717, %s35, 1
      %s719 = smul.addr %s718, 8
      %s720 = scalar_lea.vmem %s4, %s719
      %p721 = pneg %p169
      %p722 = pneg %p166
      %p723 = scmp.lt.s32.totalorder %s35, 1
      %s724 = scalar_select %p723, %s35, 1
      %s725 = smul.addr %s724, 8
      %s726 = scalar_lea.vmem %s5, %s725
      %p727 = pneg %p195
      %p728 = pneg %p192
      %p729 = scmp.lt.s32.totalorder %s35, 1
      %s730 = scalar_select %p729, %s35, 1
      %s731 = smul.addr %s730, 8
      %s732 = scalar_lea.vmem %s6, %s731
      %p733 = pneg %p221
      %p734 = pneg %p218
      %p735 = scmp.lt.s32.totalorder %s35, 1
      %s736 = scalar_select %p735, %s35, 1
      %s737 = smul.addr %s736, 8
      %s738 = scalar_lea.vmem %s7, %s737
      %p739 = pneg %p247
      %p740 = pneg %p244
      %p741 = scmp.lt.s32.totalorder %s35, 1
      %s742 = scalar_select %p741, %s35, 1
      %s743 = smul.addr %s742, 8
      %s744 = scalar_lea.vmem %s8, %s743
      %p745 = pneg %p273
      %p746 = pneg %p270
      %p747 = scmp.lt.s32.totalorder %s35, 1
      %s748 = scalar_select %p747, %s35, 1
      %s749 = smul.addr %s748, 8
      %s750 = scalar_lea.vmem %s9, %s749
      %p751 = pneg %p299
      %p752 = pneg %p296
      %p753 = scmp.lt.s32.totalorder %s35, 1
      %s754 = scalar_select %p753, %s35, 1
      %s755 = smul.addr %s754, 8
      %s756 = scalar_lea.vmem %s10, %s755
      %p757 = pneg %p325
      %p758 = pneg %p322
      %p759 = scmp.lt.s32.totalorder %s35, 1
      %s760 = scalar_select %p759, %s35, 1
      %s761 = smul.addr %s760, 8
      %s762 = scalar_lea.vmem %s11, %s761
      %p763 = pneg %p351
      %p764 = pneg %p348
      %p765 = scmp.lt.s32.totalorder %s35, 1
      %s766 = scalar_select %p765, %s35, 1
      %s767 = smul.addr %s766, 8
      %s768 = scalar_lea.vmem %s12, %s767
      %p769 = pneg %p377
      %p770 = pneg %p374
      %p771 = scmp.lt.s32.totalorder %s35, 1
      %s772 = scalar_select %p771, %s35, 1
      %s773 = smul.addr %s772, 8
      %s774 = scalar_lea.vmem %s13, %s773
      %p775 = pneg %p403
      %p776 = pneg %p400
      %p777 = scmp.lt.s32.totalorder %s35, 1
      %s778 = scalar_select %p777, %s35, 1
      %s779 = smul.addr %s778, 4
      %s780 = smul.addr %s779, 8
      %s781 = scalar_lea.vmem %s14, %s780
      %p782 = pneg %p429
      %p783 = pneg %p426
      %p784 = pneg %p450
      %p785 = pneg %p447
      %p786 = pneg %p471
      %p787 = pneg %p468
      %p788 = pneg %p492
      %p789 = pneg %p489
      %p790 = pneg %p513
      %p791 = pneg %p510
      %p792 = pneg %p539
      %p793 = pneg %p536
      %p794 = scmp.lt.s32.totalorder %s34, 1
      %s795 = scalar_select %p794, %s34, 1
      %s796 = smul.addr %s795, 8
      %s797 = smul.addr %s796, 8
      %s798 = scalar_lea.vmem %s19, %s797
      %p799 = scmp.lt.s32.totalorder %s34, 1
      %s800 = scalar_select %p799, %s34, 1
      %p801 = scmp.lt.s32.totalorder %s35, 1
      %s802 = scalar_select %p801, %s35, 1
      %s803 = smul.addr %s802, 2
      %s804 = smul.addr %s800, 4
      %s805 = sadd.s32 %s803, %s804
      %s806 = smul.addr %s805, 2
      %s807 = scalar_lea.vmem %s0, %s806
      %p808 = scmp.lt.s32.totalorder %s35, 1
      %s809 = scalar_select %p808, %s35, 1
      %s810 = smul.addr %s809, 8
      %s811 = scalar_lea.vmem %s1, %s810
      %p812 = scmp.lt.s32.totalorder %s35, 1
      %s813 = scalar_select %p812, %s35, 1
      %s814 = smul.addr %s813, 8
      %s815 = scalar_lea.vmem %s2, %s814
      %p816 = scmp.lt.s32.totalorder %s35, 1
      %s817 = scalar_select %p816, %s35, 1
      %s818 = smul.addr %s817, 8
      %s819 = scalar_lea.vmem %s3, %s818
      %p820 = scmp.lt.s32.totalorder %s35, 1
      %s821 = scalar_select %p820, %s35, 1
      %s822 = smul.addr %s821, 8
      %s823 = scalar_lea.vmem %s4, %s822
      %p824 = scmp.lt.s32.totalorder %s35, 1
      %s825 = scalar_select %p824, %s35, 1
      %s826 = smul.addr %s825, 8
      %s827 = scalar_lea.vmem %s5, %s826
      %p828 = scmp.lt.s32.totalorder %s35, 1
      %s829 = scalar_select %p828, %s35, 1
      %s830 = smul.addr %s829, 8
      %s831 = scalar_lea.vmem %s6, %s830
      %p832 = scmp.lt.s32.totalorder %s35, 1
      %s833 = scalar_select %p832, %s35, 1
      %s834 = smul.addr %s833, 8
      %s835 = scalar_lea.vmem %s7, %s834
      %p836 = scmp.lt.s32.totalorder %s35, 1
      %s837 = scalar_select %p836, %s35, 1
      %s838 = smul.addr %s837, 8
      %s839 = scalar_lea.vmem %s8, %s838
      %p840 = scmp.lt.s32.totalorder %s35, 1
      %s841 = scalar_select %p840, %s35, 1
      %s842 = smul.addr %s841, 8
      %s843 = scalar_lea.vmem %s9, %s842
      %p844 = scmp.lt.s32.totalorder %s35, 1
      %s845 = scalar_select %p844, %s35, 1
      %s846 = smul.addr %s845, 8
      %s847 = scalar_lea.vmem %s10, %s846
      %p848 = scmp.lt.s32.totalorder %s35, 1
      %s849 = scalar_select %p848, %s35, 1
      %s850 = smul.addr %s849, 8
      %s851 = scalar_lea.vmem %s11, %s850
      %p852 = scmp.lt.s32.totalorder %s35, 1
      %s853 = scalar_select %p852, %s35, 1
      %s854 = smul.addr %s853, 8
      %s855 = scalar_lea.vmem %s12, %s854
      %p856 = scmp.lt.s32.totalorder %s35, 1
      %s857 = scalar_select %p856, %s35, 1
      %s858 = smul.addr %s857, 8
      %s859 = scalar_lea.vmem %s13, %s858
      %p860 = scmp.lt.s32.totalorder %s35, 1
      %s861 = scalar_select %p860, %s35, 1
      %s862 = smul.addr %s861, 4
      %s863 = smul.addr %s862, 8
      %s864 = scalar_lea.vmem %s14, %s863
      %p865 = scmp.lt.s32.totalorder %s34, 1
      %s866 = scalar_select %p865, %s34, 1
      %s867 = smul.addr %s866, 8
      %s868 = smul.addr %s867, 8
      %s869 = scalar_lea.vmem %s19, %s868
      %v870 = vld [vmem:[%s807] sm:$0xf]
      %871 = vst [vmem:[#allocation2] sm:$0xff] 0.0
      %872 = vst [vmem:[#allocation2 + $0x2] sm:$0xf] %v870
      %v873 = vld [vmem:[%s17] sm:$0xff]
      %v874 = vld [vmem:[%s17 + $0x8] sm:$0xff]
      %v875 = vld [vmem:[%s17 + $0x10] sm:$0xff]
      %v876 = vld [vmem:[%s17 + $0x18] sm:$0xff]
      %v877 = vld [vmem:[%s17 + $0x20] sm:$0x3]
      %v878 = vld [vmem:[%s17 + $0x28] sm:$0x3]
      %v879 = vld [vmem:[#allocation2] sm:$0x3f]
      %v880 = vld [vmem:[#allocation2 + $0x2] sm:$0xf]
      %v881 = vld [vmem:[#allocation2 + $0x2] sm:$0x3f]
      %v883 = vcombine.high %v879, %v879
      %v885 = vunpack.c.l.s4 1983009808
      %v886 = vunpack.c.0.s8 %v885
      %v887 = vlaneseq
      %v888 = vshrl.u32 %v887, 7
      %v889 = vsub.s32 %v886, %v888
      %v890 = vrot.slane %v879, %v889
      %v892 = vunpack.c.l.s4 1983009808
      %v893 = vunpack.c.0.s8 %v892
      %v894 = vlaneseq
      %v895 = vshrl.u32 %v894, 7
      %v896 = vsub.s32 %v893, %v895
      %v897 = vrot.slane %v883, %v896
      %v898 = vcombine.high %v890, %v890
      %v902 = vcombine.low %v879, %v879
      %v904 = vunpack.c.l.s4 1983009808
      %v905 = vunpack.c.0.s8 %v904
      %v906 = vlaneseq
      %v907 = vshrl.u32 %v906, 7
      %v908 = vsub.s32 %v905, %v907
      %v909 = vrot.slane %v902, %v908
      %v910 = vcombine.high %v909, %v909
      %911 = vrot.lane.b32.xlu0 %v909, 124
      %v912 = vpop.permute.xlu0 %911
      %913 = vrot.lane.b32.xlu0 %v910, 124
      %v914 = vpop.permute.xlu0 %913
      %915 = vrot.lane.b32.xlu0 %v890, 124
      %v916 = vpop.permute.xlu0 %915
      %vm917 = vcmask 1014784
      %v918 = vsel %vm917, %v912, %v914
      %v919 = vsel %vm917, %v914, %v916
      %v923 = vcombine.low %v890, %v890
      %v924 = vcombine.low %v897, %v897
      %925 = vrot.lane.b32.xlu0 %v923, 120
      %v926 = vpop.permute.xlu0 %925
      %927 = vrot.lane.b32.xlu0 %v890, 120
      %v928 = vpop.permute.xlu0 %927
      %929 = vrot.lane.b32.xlu0 %v924, 120
      %v930 = vpop.permute.xlu0 %929
      %vm931 = vcmask 982016
      %v932 = vsel %vm931, %v926, %v928
      %v933 = vsel %vm931, %v928, %v930
      %v937 = vcombine.low %v909, %v909
      %938 = vrot.lane.b32.xlu0 %v937, 64
      %v939 = vpop.permute.xlu0 %938
      %940 = vrot.lane.b32.xlu0 %v909, 64
      %v941 = vpop.permute.xlu0 %940
      %942 = vrot.lane.b32.xlu0 %v923, 64
      %v943 = vpop.permute.xlu0 %942
      %vm944 = vcmask 523264
      %v945 = vsel %vm944, %v939, %v941
      %v946 = vsel %vm944, %v941, %v943
      %v952 = vunpack.c.l.s4 1983009808
      %v953 = vunpack.c.0.s8 %v952
      %v954 = vlaneseq
      %v955 = vshrl.u32 %v954, 7
      %v956 = vsub.s32 %v953, %v955
      %v957 = vrot.slane %v880, %v956
      %v958 = vcombine.high %v957, %v957
      %959 = vrot.lane.b32.xlu0 %v957, 60
      %v960 = vpop.permute.xlu0 %959
      %961 = vrot.lane.b32.xlu0 %v958, 60
      %v962 = vpop.permute.xlu0 %961
      %vm963 = vcmask 490496
      %v964 = vsel %vm963, %v960, %v962
      %v969 = vcombine.low %v881, %v881
      %v971 = vunpack.c.l.s4 1983009808
      %v972 = vunpack.c.0.s8 %v971
      %v973 = vlaneseq
      %v974 = vshrl.u32 %v973, 7
      %v975 = vsub.s32 %v972, %v974
      %v976 = vrot.slane %v969, %v975
      %v978 = vunpack.c.l.s4 1983009808
      %v979 = vunpack.c.0.s8 %v978
      %v980 = vlaneseq
      %v981 = vshrl.u32 %v980, 7
      %v982 = vsub.s32 %v979, %v981
      %v983 = vrot.slane %v881, %v982
      %v984 = vcombine.high %v976, %v976
      %985 = vrot.lane.b32.xlu0 %v976, 56
      %v986 = vpop.permute.xlu0 %985
      %987 = vrot.lane.b32.xlu0 %v984, 56
      %v988 = vpop.permute.xlu0 %987
      %989 = vrot.lane.b32.xlu0 %v983, 56
      %v990 = vpop.permute.xlu0 %989
      %vm991 = vcmask 457728
      %v992 = vsel %vm991, %v986, %v988
      %v993 = vsel %vm991, %v988, %v990
      %v997 = vcombine.high %v881, %v881
      %v999 = vunpack.c.l.s4 1983009808
      %v1000 = vunpack.c.0.s8 %v999
      %v1001 = vlaneseq
      %v1002 = vshrl.u32 %v1001, 7
      %v1003 = vsub.s32 %v1000, %v1002
      %v1004 = vrot.slane %v997, %v1003
      %v1005 = vcombine.low %v983, %v983
      %v1006 = vcombine.low %v1004, %v1004
      %v1010 = vcombine.low %v976, %v976
      %1011 = vrot.lane.b32.xlu0 %v1010, 124
      %v1012 = vpop.permute.xlu0 %1011
      %1013 = vrot.lane.b32.xlu0 %v976, 124
      %v1014 = vpop.permute.xlu0 %1013
      %1015 = vrot.lane.b32.xlu0 %v1005, 124
      %v1016 = vpop.permute.xlu0 %1015
      %v1017 = vsel %vm917, %v1012, %v1014
      %v1018 = vsel %vm917, %v1014, %v1016
      %v1022 = vcombine.high %v983, %v983
      %1023 = vrot.lane.b32.xlu0 %v983, 120
      %v1024 = vpop.permute.xlu0 %1023
      %1025 = vrot.lane.b32.xlu0 %v1022, 120
      %v1026 = vpop.permute.xlu0 %1025
      %1027 = vrot.lane.b32.xlu0 %v1004, 120
      %v1028 = vpop.permute.xlu0 %1027
      %v1029 = vsel %vm931, %v1024, %v1026
      %v1030 = vsel %vm931, %v1026, %v1028
      %vm1034 = vcmask 1041408
      %v1035 = vsel %vm1034, %v890, %v918
      %v1036 = vsel %vm1034, %v898, %v919
      %v1037 = vsel %vm1034, %v897, %v916
      %vm1038 = vcmask 1043456
      %v1039 = vsel %vm1038, %v1035, %v932
      %v1040 = vsel %vm1038, %v1036, %v933
      %v1041 = vsel %vm1038, %v1037, %v930
      %vm1042 = vcmask 1045504
      %v1043 = vsel %vm1042, %v1039, %v945
      %v1044 = vsel %vm1042, %v1040, %v946
      %v1045 = vsel %vm1042, %v1041, %v943
      %v1046 = vsel %vm1034, %v960, %v986
      %v1047 = vsel %vm1034, %v964, %v992
      %v1048 = vsel %vm1034, %v962, %v993
      %v1049 = vsel %vm1038, %v1046, %v1005
      %v1050 = vsel %vm1038, %v1047, %v983
      %v1051 = vsel %vm1038, %v1048, %v1006
      %v1052 = vsel %vm1042, %v1049, %v1017
      %v1053 = vsel %vm1042, %v1050, %v1018
      %v1054 = vsel %vm1042, %v1051, %v1016
      %1061 = vrot.lane.b32.xlu0 %v873, 60
      %v1062 = vpop.permute.xlu0 %1061
      %1063 = vrot.lane.b32.xlu0 %v874, 60
      %v1064 = vpop.permute.xlu0 %1063
      %1065 = vrot.lane.b32.xlu0 %v875, 60
      %v1066 = vpop.permute.xlu0 %1065
      %1067 = vrot.lane.b32.xlu0 %v876, 60
      %v1068 = vpop.permute.xlu0 %1067
      %1069 = vrot.lane.b32.xlu0 %v877, 60
      %v1070 = vpop.permute.xlu0 %1069
      %1071 = vrot.lane.b32.xlu0 %v878, 60
      %v1072 = vpop.permute.xlu0 %1071
      %v1073 = vsel %vm963, %v1062, %v1064
      %v1074 = vsel %vm963, %v1066, %v1068
      %v1075 = vsel %vm963, %v1070, %v1072
      %v1085 = vmul.f32 %v1043, %v1062
      %v1086 = vmul.f32 %v1044, %v1073
      %v1087 = vmul.f32 %v1045, %v1064
      %v1088 = vmul.f32 %v1052, %v1066
      %v1089 = vmul.f32 %v1053, %v1074
      %v1090 = vmul.f32 %v1054, %v1068
      %v1091 = vmul.f32 %v1029, %v1070
      %v1092 = vmul.f32 %v1030, %v1075
      %v1093 = vmul.f32 %v1028, %v1072
      %v1094 = vld [vmem:[%s811] sm:$0xff]
      %v1095 = vld [vmem:[%s815] sm:$0xff]
      %1097 = vset.pattern.permute.xlu0 0
      %1098 = vperm.xlu0 %1097, %v1095
      %v1099 = vpop.permute.xlu0 %1098
      %1110 = vrot.lane.b32.xlu0 %v1085, 68
      %v1111 = vpop.permute.xlu0 %1110
      %1112 = vrot.lane.b32.xlu0 %v1086, 68
      %v1113 = vpop.permute.xlu0 %1112
      %1114 = vrot.lane.b32.xlu0 %v1087, 68
      %v1115 = vpop.permute.xlu0 %1114
      %1116 = vrot.lane.b32.xlu0 %v1088, 68
      %v1117 = vpop.permute.xlu0 %1116
      %1118 = vrot.lane.b32.xlu0 %v1089, 68
      %v1119 = vpop.permute.xlu0 %1118
      %1120 = vrot.lane.b32.xlu0 %v1090, 68
      %v1121 = vpop.permute.xlu0 %1120
      %1122 = vrot.lane.b32.xlu0 %v1091, 68
      %v1123 = vpop.permute.xlu0 %1122
      %1124 = vrot.lane.b32.xlu0 %v1092, 68
      %v1125 = vpop.permute.xlu0 %1124
      %1126 = vrot.lane.b32.xlu0 %v1093, 68
      %v1127 = vpop.permute.xlu0 %1126
      %vm1128 = vcmask 556032
      %v1129 = vsel %vm1128, %v1111, %v1113
      %v1130 = vsel %vm1128, %v1113, %v1115
      %v1131 = vsel %vm1128, %v1117, %v1119
      %v1132 = vsel %vm1128, %v1119, %v1121
      %v1133 = vsel %vm1128, %v1123, %v1125
      %v1134 = vsel %vm1128, %v1125, %v1127
      %vm1139 = vcmask 146432
      %v1141 = vsel %vm1139, %v1094, 0
      %v1143 = vsel %vm1034, %v1133, 0
      %v1145 = vsel %vm1034, %v1134, 0
      %1147 = vmatprep.subr.mxu0 %v1130
      %1148 = vmatpush1.msra.mxu0 %v1129
      %1149 = vmatprep.subr.mxu0 %v1132
      %1150 = vmatpush1.msra.mxu0 %v1131
      %1151 = vmatprep.subr.mxu0 %v1145
      %1152 = vmatpush1.msra.mxu0 %v1143
      %1153 = vmatprep.subr.mxu0 0.0
      %1154 = vmatpush1.msra.mxu0 0.0
      %1155 = vmatprep.subr.mxu0 0.0
      %1156 = vmatpush1.msra.mxu0 0.0
      %1157 = vmatprep.subr.mxu0 0.0
      %1158 = vmatpush1.msra.mxu0 0.0
      %1159 = vmatprep.subr.mxu0 0.0
      %1160 = vmatpush1.msra.mxu0 0.0
      %1161 = vmatprep.subr.mxu0 0.0
      %1162 = vmatpush1.msra.mxu0 0.0
      %1163 = vmatprep.subr.mxu0 0.0
      %1164 = vmatpush1.msra.mxu0 0.0
      %1165 = vmatprep.subr.mxu0 0.0
      %1166 = vmatpush1.msra.mxu0 0.0
      %1167 = vmatprep.subr.mxu0 0.0
      %1168 = vmatpush1.msra.mxu0 0.0
      %1169 = vmatprep.subr.mxu0 0.0
      %1170 = vmatpush1.msra.mxu0 0.0
      %1171 = vmatprep.subr.mxu0 0.0
      %1172 = vmatpush1.msra.mxu0 0.0
      %1173 = vmatprep.subr.mxu0 0.0
      %1174 = vmatpush1.msra.mxu0 0.0
      %1175 = vmatprep.subr.mxu0 0.0
      %1176 = vmatpush1.msra.mxu0 0.0
      %1177 = vmatprep.subr.mxu0 0.0
      %1178 = vmatpush1.msra.mxu0 0.0
      %1179 = vmatprep.subr.mxu0 0.0
      %1180 = vmatpush1.msra.mxu0 0.0
      %1181 = vmatprep.subr.mxu0 0.0
      %1182 = vmatpush1.msra.mxu0 0.0
      %1183 = vmatprep.subr.mxu0 0.0
      %1184 = vmatpush1.msra.mxu0 0.0
      %1185 = vmatprep.subr.mxu0 0.0
      %1186 = vmatpush1.msra.mxu0 0.0
      %1187 = vmatprep.subr.mxu0 0.0
      %1188 = vmatpush1.msra.mxu0 0.0
      %1189 = vmatprep.subr.mxu0 0.0
      %1190 = vmatpush1.msra.mxu0 0.0
      %1191 = vmatprep.subr.mxu0 0.0
      %1192 = vmatpush1.msra.mxu0 0.0
      %1193 = vmatprep.subr.mxu0 0.0
      %1194 = vmatpush1.msra.mxu0 0.0
      %1195 = vmatprep.subr.mxu0 0.0
      %1196 = vmatpush1.msra.mxu0 0.0
      %1197 = vmatprep.subr.mxu0 0.0
      %1198 = vmatpush1.msra.mxu0 0.0
      %1199 = vmatprep.subr.mxu0 0.0
      %1200 = vmatpush1.msra.mxu0 0.0
      %1201 = vmatprep.subr.mxu0 0.0
      %1202 = vmatpush1.msra.mxu0 0.0
      %1203 = vmatprep.subr.mxu0 0.0
      %1204 = vmatpush1.msra.mxu0 0.0
      %1205 = vmatprep.subr.mxu0 0.0
      %1206 = vmatpush1.msra.mxu0 0.0
      %1207 = vmatprep.subr.mxu0 0.0
      %1208 = vmatpush1.msra.mxu0 0.0
      %1209 = vmatprep.subr.mxu0 0.0
      %1210 = vmatpush1.msra.mxu0 0.0
      %1211 = vmatprep.mubr.f32.mxu0 0.0
      %1212 = vmatmul.mubr.f32.gmra.mrb[0].mxu0 %v1141
      %v1213 = vpop.f32.mrb[0].mxu0
      %v1214 = vadd.f32 %v1099, %v1213
      %v1215 = vpop.f32.mrb[0].mxu0
      %v1216 = vadd.f32 %v1099, %v1215
      %1217 = vdwg.mxu0
      %v1218 = vld [vmem:[%s819] sm:$0xff]
      %vm1219 = vcmp.ge.f32.partialorder %v1214, 0.0
      %vm1220 = vcmp.ge.f32.partialorder %v1216, 0.0
      %1222 = vset.pattern.permute.xlu0 0
      %1223 = vperm.xlu0 %1222, %v1218
      %v1224 = vpop.permute.xlu0 %1223
      %v1226 = vmul.f32 %v1224, %v1214
      %v1227 = vmul.f32 %v1224, %v1216
      %v1228 = vsel %vm1219, %v1214, %v1226
      %v1229 = vsel %vm1220, %v1216, %v1227
      %v1230 = vld [vmem:[%s823] sm:$0xff]
      %v1231 = vld [vmem:[%s827] sm:$0xff]
      %1233 = vset.pattern.permute.xlu0 0
      %1234 = vperm.xlu0 %1233, %v1231
      %v1235 = vpop.permute.xlu0 %1234
      %vm1237 = vcmask 64512
      %v1239 = vsel %vm1237, %v1230, 0
      %1241 = vmatprep.subr.mxu0 %v1229
      %1242 = vmatpush1.msra.mxu0 %v1228
      %1243 = vmatprep.subr.mxu0 0.0
      %1244 = vmatpush1.msra.mxu0 0.0
      %1245 = vmatprep.subr.mxu0 0.0
      %1246 = vmatpush1.msra.mxu0 0.0
      %1247 = vmatprep.subr.mxu0 0.0
      %1248 = vmatpush1.msra.mxu0 0.0
      %1249 = vmatprep.subr.mxu0 0.0
      %1250 = vmatpush1.msra.mxu0 0.0
      %1251 = vmatprep.subr.mxu0 0.0
      %1252 = vmatpush1.msra.mxu0 0.0
      %1253 = vmatprep.subr.mxu0 0.0
      %1254 = vmatpush1.msra.mxu0 0.0
      %1255 = vmatprep.subr.mxu0 0.0
      %1256 = vmatpush1.msra.mxu0 0.0
      %1257 = vmatprep.subr.mxu0 0.0
      %1258 = vmatpush1.msra.mxu0 0.0
      %1259 = vmatprep.subr.mxu0 0.0
      %1260 = vmatpush1.msra.mxu0 0.0
      %1261 = vmatprep.subr.mxu0 0.0
      %1262 = vmatpush1.msra.mxu0 0.0
      %1263 = vmatprep.subr.mxu0 0.0
      %1264 = vmatpush1.msra.mxu0 0.0
      %1265 = vmatprep.subr.mxu0 0.0
      %1266 = vmatpush1.msra.mxu0 0.0
      %1267 = vmatprep.subr.mxu0 0.0
      %1268 = vmatpush1.msra.mxu0 0.0
      %1269 = vmatprep.subr.mxu0 0.0
      %1270 = vmatpush1.msra.mxu0 0.0
      %1271 = vmatprep.subr.mxu0 0.0
      %1272 = vmatpush1.msra.mxu0 0.0
      %1273 = vmatprep.subr.mxu0 0.0
      %1274 = vmatpush1.msra.mxu0 0.0
      %1275 = vmatprep.subr.mxu0 0.0
      %1276 = vmatpush1.msra.mxu0 0.0
      %1277 = vmatprep.subr.mxu0 0.0
      %1278 = vmatpush1.msra.mxu0 0.0
      %1279 = vmatprep.subr.mxu0 0.0
      %1280 = vmatpush1.msra.mxu0 0.0
      %1281 = vmatprep.subr.mxu0 0.0
      %1282 = vmatpush1.msra.mxu0 0.0
      %1283 = vmatprep.subr.mxu0 0.0
      %1284 = vmatpush1.msra.mxu0 0.0
      %1285 = vmatprep.subr.mxu0 0.0
      %1286 = vmatpush1.msra.mxu0 0.0
      %1287 = vmatprep.subr.mxu0 0.0
      %1288 = vmatpush1.msra.mxu0 0.0
      %1289 = vmatprep.subr.mxu0 0.0
      %1290 = vmatpush1.msra.mxu0 0.0
      %1291 = vmatprep.subr.mxu0 0.0
      %1292 = vmatpush1.msra.mxu0 0.0
      %1293 = vmatprep.subr.mxu0 0.0
      %1294 = vmatpush1.msra.mxu0 0.0
      %1295 = vmatprep.subr.mxu0 0.0
      %1296 = vmatpush1.msra.mxu0 0.0
      %1297 = vmatprep.subr.mxu0 0.0
      %1298 = vmatpush1.msra.mxu0 0.0
      %1299 = vmatprep.subr.mxu0 0.0
      %1300 = vmatpush1.msra.mxu0 0.0
      %1301 = vmatprep.subr.mxu0 0.0
      %1302 = vmatpush1.msra.mxu0 0.0
      %1303 = vmatprep.subr.mxu0 0.0
      %1304 = vmatpush1.msra.mxu0 0.0
      %1305 = vmatprep.mubr.f32.mxu0 0.0
      %1306 = vmatmul.mubr.f32.gmra.mrb[0].mxu0 %v1239
      %v1307 = vpop.f32.mrb[0].mxu0
      %v1308 = vadd.f32 %v1235, %v1307
      %v1309 = vpop.f32.mrb[0].mxu0
      %v1310 = vadd.f32 %v1235, %v1309
      %1311 = vdwg.mxu0
      %v1312 = vld [vmem:[%s831] sm:$0xff]
      %vm1313 = vcmp.ge.f32.partialorder %v1308, 0.0
      %vm1314 = vcmp.ge.f32.partialorder %v1310, 0.0
      %1316 = vset.pattern.permute.xlu0 0
      %1317 = vperm.xlu0 %1316, %v1312
      %v1318 = vpop.permute.xlu0 %1317
      %v1320 = vmul.f32 %v1318, %v1308
      %v1321 = vmul.f32 %v1318, %v1310
      %v1322 = vsel %vm1313, %v1308, %v1320
      %v1323 = vsel %vm1314, %v1310, %v1321
      %1324 = vst [vmem:[#allocation3] sm:$0xff] 0.0
      %1325 = vst [vmem:[#allocation3 + $0x8] sm:$0xff] 0.0
      %1326 = vst [vmem:[#allocation3 + $0x10] sm:$0xff] 0.0
      %1327 = vst [vmem:[#allocation3 + $0x18] sm:$0xff] 0.0
      %1328 = vst [vmem:[#allocation3 + $0x8] sm:$0xff] %v1322
      %1329 = vst [vmem:[#allocation3 + $0x10] sm:$0xff] %v1323
      %v1330 = vld [vmem:[%s18] sm:$0xff]
      %v1331 = vld [vmem:[%s18 + $0x8] sm:$0xff]
      %v1332 = vld [vmem:[%s18 + $0x10] sm:$0xff]
      %v1333 = vld [vmem:[%s18 + $0x18] sm:$0xff]
      %v1334 = vld [vmem:[%s18 + $0x20] sm:$0xff]
      %v1335 = vld [vmem:[%s18 + $0x28] sm:$0xff]
      %v1336 = vld [vmem:[%s18 + $0x30] sm:$0xff]
      %v1337 = vld [vmem:[%s18 + $0x38] sm:$0xff]
      %v1338 = vld [vmem:[%s18 + $0x40] sm:$0xff]
      %v1339 = vld [vmem:[%s18 + $0x48] sm:$0xff]
      %v1340 = vld [vmem:[%s18 + $0x50] sm:$0xff]
      %v1341 = vld [vmem:[%s18 + $0x58] sm:$0xff]
      %v1342 = vld [vmem:[%s18 + $0x60] sm:$0xff]
      %v1343 = vld [vmem:[%s18 + $0x68] sm:$0xff]
      %v1344 = vld [vmem:[%s18 + $0x70] sm:$0xff]
      %v1345 = vld [vmem:[%s18 + $0x78] sm:$0xff]
      %v1346 = vld [vmem:[%s18 + $0x80] sm:$0xff]
      %v1347 = vld [vmem:[%s18 + $0x88] sm:$0xff]
      %v1348 = vld [vmem:[#allocation3] sm:$0xff]
      %v1349 = vld [vmem:[#allocation3 + $0x8] sm:$0xff]
      %v1350 = vld [vmem:[#allocation3 + $0x10] sm:$0xff]
      %v1351 = vld [vmem:[#allocation3 + $0x8] sm:$0xff]
      %v1352 = vld [vmem:[#allocation3 + $0x10] sm:$0xff]
      %v1353 = vld [vmem:[#allocation3 + $0x18] sm:$0xff]
      %1357 = vrot.lane.b32.xlu0 %v1348, 127
      %v1358 = vpop.permute.xlu0 %1357
      %1359 = vrot.lane.b32.xlu0 %v1349, 127
      %v1360 = vpop.permute.xlu0 %1359
      %1361 = vrot.lane.b32.xlu0 %v1350, 127
      %v1362 = vpop.permute.xlu0 %1361
      %vm1363 = vcmask 1039360
      %v1364 = vsel %vm1363, %v1358, %v1360
      %v1365 = vsel %vm1363, %v1360, %v1362
      %1369 = vrot.lane.b32.xlu0 %v1348, 126
      %v1370 = vpop.permute.xlu0 %1369
      %1371 = vrot.lane.b32.xlu0 %v1349, 126
      %v1372 = vpop.permute.xlu0 %1371
      %1373 = vrot.lane.b32.xlu0 %v1350, 126
      %v1374 = vpop.permute.xlu0 %1373
      %vm1375 = vcmask 1031168
      %v1376 = vsel %vm1375, %v1370, %v1372
      %v1377 = vsel %vm1375, %v1372, %v1374
      %1381 = vrot.lane.b32.xlu0 %v1348, 112
      %v1382 = vpop.permute.xlu0 %1381
      %1383 = vrot.lane.b32.xlu0 %v1349, 112
      %v1384 = vpop.permute.xlu0 %1383
      %1385 = vrot.lane.b32.xlu0 %v1350, 112
      %v1386 = vpop.permute.xlu0 %1385
      %vm1387 = vcmask 916480
      %v1388 = vsel %vm1387, %v1382, %v1384
      %v1389 = vsel %vm1387, %v1384, %v1386
      %1393 = vrot.lane.b32.xlu0 %v1349, 111
      %v1394 = vpop.permute.xlu0 %1393
      %1395 = vrot.lane.b32.xlu0 %v1350, 111
      %v1396 = vpop.permute.xlu0 %1395
      %vm1397 = vcmask 908288
      %v1398 = vsel %vm1397, %v1394, %v1396
      %1405 = vrot.lane.b32.xlu0 %v1351, 110
      %v1406 = vpop.permute.xlu0 %1405
      %1407 = vrot.lane.b32.xlu0 %v1352, 110
      %v1408 = vpop.permute.xlu0 %1407
      %1409 = vrot.lane.b32.xlu0 %v1353, 110
      %v1410 = vpop.permute.xlu0 %1409
      %vm1411 = vcmask 900096
      %v1412 = vsel %vm1411, %v1406, %v1408
      %v1413 = vsel %vm1411, %v1408, %v1410
      %1417 = vrot.lane.b32.xlu0 %v1351, 96
      %v1418 = vpop.permute.xlu0 %1417
      %1419 = vrot.lane.b32.xlu0 %v1352, 96
      %v1420 = vpop.permute.xlu0 %1419
      %1421 = vrot.lane.b32.xlu0 %v1353, 96
      %v1422 = vpop.permute.xlu0 %1421
      %vm1423 = vcmask 785408
      %v1424 = vsel %vm1423, %v1418, %v1420
      %v1425 = vsel %vm1423, %v1420, %v1422
      %1429 = vrot.lane.b32.xlu0 %v1351, 95
      %v1430 = vpop.permute.xlu0 %1429
      %1431 = vrot.lane.b32.xlu0 %v1352, 95
      %v1432 = vpop.permute.xlu0 %1431
      %1433 = vrot.lane.b32.xlu0 %v1353, 95
      %v1434 = vpop.permute.xlu0 %1433
      %vm1435 = vcmask 777216
      %v1436 = vsel %vm1435, %v1430, %v1432
      %v1437 = vsel %vm1435, %v1432, %v1434
      %1441 = vrot.lane.b32.xlu0 %v1351, 94
      %v1442 = vpop.permute.xlu0 %1441
      %1443 = vrot.lane.b32.xlu0 %v1352, 94
      %v1444 = vpop.permute.xlu0 %1443
      %1445 = vrot.lane.b32.xlu0 %v1353, 94
      %v1446 = vpop.permute.xlu0 %1445
      %vm1447 = vcmask 769024
      %v1448 = vsel %vm1447, %v1442, %v1444
      %v1449 = vsel %vm1447, %v1444, %v1446
      %1471 = vrot.lane.b32.xlu0 %v1330, 111
      %v1472 = vpop.permute.xlu0 %1471
      %1473 = vrot.lane.b32.xlu0 %v1331, 111
      %v1474 = vpop.permute.xlu0 %1473
      %1475 = vrot.lane.b32.xlu0 %v1332, 111
      %v1476 = vpop.permute.xlu0 %1475
      %1477 = vrot.lane.b32.xlu0 %v1333, 111
      %v1478 = vpop.permute.xlu0 %1477
      %1479 = vrot.lane.b32.xlu0 %v1334, 111
      %v1480 = vpop.permute.xlu0 %1479
      %1481 = vrot.lane.b32.xlu0 %v1335, 111
      %v1482 = vpop.permute.xlu0 %1481
      %1483 = vrot.lane.b32.xlu0 %v1336, 111
      %v1484 = vpop.permute.xlu0 %1483
      %1485 = vrot.lane.b32.xlu0 %v1337, 111
      %v1486 = vpop.permute.xlu0 %1485
      %1487 = vrot.lane.b32.xlu0 %v1338, 111
      %v1488 = vpop.permute.xlu0 %1487
      %1489 = vrot.lane.b32.xlu0 %v1339, 111
      %v1490 = vpop.permute.xlu0 %1489
      %1491 = vrot.lane.b32.xlu0 %v1340, 111
      %v1492 = vpop.permute.xlu0 %1491
      %1493 = vrot.lane.b32.xlu0 %v1341, 111
      %v1494 = vpop.permute.xlu0 %1493
      %1495 = vrot.lane.b32.xlu0 %v1342, 111
      %v1496 = vpop.permute.xlu0 %1495
      %1497 = vrot.lane.b32.xlu0 %v1343, 111
      %v1498 = vpop.permute.xlu0 %1497
      %1499 = vrot.lane.b32.xlu0 %v1344, 111
      %v1500 = vpop.permute.xlu0 %1499
      %1501 = vrot.lane.b32.xlu0 %v1345, 111
      %v1502 = vpop.permute.xlu0 %1501
      %1503 = vrot.lane.b32.xlu0 %v1346, 111
      %v1504 = vpop.permute.xlu0 %1503
      %1505 = vrot.lane.b32.xlu0 %v1347, 111
      %v1506 = vpop.permute.xlu0 %1505
      %v1507 = vsel %vm1397, %v1472, %v1474
      %v1508 = vsel %vm1397, %v1476, %v1478
      %v1509 = vsel %vm1397, %v1480, %v1482
      %v1510 = vsel %vm1397, %v1484, %v1486
      %v1511 = vsel %vm1397, %v1488, %v1490
      %v1512 = vsel %vm1397, %v1492, %v1494
      %v1513 = vsel %vm1397, %v1496, %v1498
      %v1514 = vsel %vm1397, %v1500, %v1502
      %v1515 = vsel %vm1397, %v1504, %v1506
      %v1543 = vmul.f32 %v1348, %v1472
      %v1544 = vmul.f32 %v1349, %v1507
      %v1545 = vmul.f32 %v1350, %v1474
      %v1546 = vmul.f32 %v1364, %v1476
      %v1547 = vmul.f32 %v1365, %v1508
      %v1548 = vmul.f32 %v1362, %v1478
      %v1549 = vmul.f32 %v1376, %v1480
      %v1550 = vmul.f32 %v1377, %v1509
      %v1551 = vmul.f32 %v1374, %v1482
      %v1552 = vmul.f32 %v1388, %v1484
      %v1553 = vmul.f32 %v1389, %v1510
      %v1554 = vmul.f32 %v1386, %v1486
      %v1555 = vmul.f32 %v1394, %v1488
      %v1556 = vmul.f32 %v1398, %v1511
      %v1557 = vmul.f32 %v1396, %v1490
      %v1558 = vmul.f32 %v1406, %v1492
      %v1559 = vmul.f32 %v1412, %v1512
      %v1560 = vmul.f32 %v1413, %v1494
      %v1561 = vmul.f32 %v1418, %v1496
      %v1562 = vmul.f32 %v1424, %v1513
      %v1563 = vmul.f32 %v1425, %v1498
      %v1564 = vmul.f32 %v1430, %v1500
      %v1565 = vmul.f32 %v1436, %v1514
      %v1566 = vmul.f32 %v1437, %v1502
      %v1567 = vmul.f32 %v1442, %v1504
      %v1568 = vmul.f32 %v1448, %v1515
      %v1569 = vmul.f32 %v1449, %v1506
      %v1570 = vld [vmem:[%s835] sm:$0xff]
      %v1571 = vld [vmem:[%s839] sm:$0xff]
      %1573 = vset.pattern.permute.xlu0 0
      %1574 = vperm.xlu0 %1573, %v1571
      %v1575 = vpop.permute.xlu0 %1574
      %1604 = vrot.lane.b32.xlu0 %v1543, 17
      %v1605 = vpop.permute.xlu0 %1604
      %1606 = vrot.lane.b32.xlu0 %v1544, 17
      %v1607 = vpop.permute.xlu0 %1606
      %1608 = vrot.lane.b32.xlu0 %v1545, 17
      %v1609 = vpop.permute.xlu0 %1608
      %1610 = vrot.lane.b32.xlu0 %v1546, 17
      %v1611 = vpop.permute.xlu0 %1610
      %1612 = vrot.lane.b32.xlu0 %v1547, 17
      %v1613 = vpop.permute.xlu0 %1612
      %1614 = vrot.lane.b32.xlu0 %v1548, 17
      %v1615 = vpop.permute.xlu0 %1614
      %1616 = vrot.lane.b32.xlu0 %v1549, 17
      %v1617 = vpop.permute.xlu0 %1616
      %1618 = vrot.lane.b32.xlu0 %v1550, 17
      %v1619 = vpop.permute.xlu0 %1618
      %1620 = vrot.lane.b32.xlu0 %v1551, 17
      %v1621 = vpop.permute.xlu0 %1620
      %1622 = vrot.lane.b32.xlu0 %v1552, 17
      %v1623 = vpop.permute.xlu0 %1622
      %1624 = vrot.lane.b32.xlu0 %v1553, 17
      %v1625 = vpop.permute.xlu0 %1624
      %1626 = vrot.lane.b32.xlu0 %v1554, 17
      %v1627 = vpop.permute.xlu0 %1626
      %1628 = vrot.lane.b32.xlu0 %v1555, 17
      %v1629 = vpop.permute.xlu0 %1628
      %1630 = vrot.lane.b32.xlu0 %v1556, 17
      %v1631 = vpop.permute.xlu0 %1630
      %1632 = vrot.lane.b32.xlu0 %v1557, 17
      %v1633 = vpop.permute.xlu0 %1632
      %1634 = vrot.lane.b32.xlu0 %v1558, 17
      %v1635 = vpop.permute.xlu0 %1634
      %1636 = vrot.lane.b32.xlu0 %v1559, 17
      %v1637 = vpop.permute.xlu0 %1636
      %1638 = vrot.lane.b32.xlu0 %v1560, 17
      %v1639 = vpop.permute.xlu0 %1638
      %1640 = vrot.lane.b32.xlu0 %v1561, 17
      %v1641 = vpop.permute.xlu0 %1640
      %1642 = vrot.lane.b32.xlu0 %v1562, 17
      %v1643 = vpop.permute.xlu0 %1642
      %1644 = vrot.lane.b32.xlu0 %v1563, 17
      %v1645 = vpop.permute.xlu0 %1644
      %1646 = vrot.lane.b32.xlu0 %v1564, 17
      %v1647 = vpop.permute.xlu0 %1646
      %1648 = vrot.lane.b32.xlu0 %v1565, 17
      %v1649 = vpop.permute.xlu0 %1648
      %1650 = vrot.lane.b32.xlu0 %v1566, 17
      %v1651 = vpop.permute.xlu0 %1650
      %1652 = vrot.lane.b32.xlu0 %v1567, 17
      %v1653 = vpop.permute.xlu0 %1652
      %1654 = vrot.lane.b32.xlu0 %v1568, 17
      %v1655 = vpop.permute.xlu0 %1654
      %1656 = vrot.lane.b32.xlu0 %v1569, 17
      %v1657 = vpop.permute.xlu0 %1656
      %vm1658 = vcmask 138240
      %v1659 = vsel %vm1658, %v1605, %v1607
      %v1660 = vsel %vm1658, %v1607, %v1609
      %v1661 = vsel %vm1658, %v1611, %v1613
      %v1662 = vsel %vm1658, %v1613, %v1615
      %v1663 = vsel %vm1658, %v1617, %v1619
      %v1664 = vsel %vm1658, %v1619, %v1621
      %v1665 = vsel %vm1658, %v1623, %v1625
      %v1666 = vsel %vm1658, %v1625, %v1627
      %v1667 = vsel %vm1658, %v1629, %v1631
      %v1668 = vsel %vm1658, %v1631, %v1633
      %v1669 = vsel %vm1658, %v1635, %v1637
      %v1670 = vsel %vm1658, %v1637, %v1639
      %v1671 = vsel %vm1658, %v1641, %v1643
      %v1672 = vsel %vm1658, %v1643, %v1645
      %v1673 = vsel %vm1658, %v1647, %v1649
      %v1674 = vsel %vm1658, %v1649, %v1651
      %v1675 = vsel %vm1658, %v1653, %v1655
      %v1676 = vsel %vm1658, %v1655, %v1657
      %vm1695 = vcmask 588800
      %v1697 = vsel %vm1695, %v1570, 0
      %1699 = vmatprep.subr.mxu0 %v1660
      %1700 = vmatpush1.msra.mxu0 %v1659
      %1701 = vmatprep.subr.mxu0 %v1662
      %1702 = vmatpush1.msra.mxu0 %v1661
      %1703 = vmatprep.subr.mxu0 %v1664
      %1704 = vmatpush1.msra.mxu0 %v1663
      %1705 = vmatprep.subr.mxu0 %v1666
      %1706 = vmatpush1.msra.mxu0 %v1665
      %1707 = vmatprep.subr.mxu0 %v1668
      %1708 = vmatpush1.msra.mxu0 %v1667
      %1709 = vmatprep.subr.mxu0 %v1670
      %1710 = vmatpush1.msra.mxu0 %v1669
      %1711 = vmatprep.subr.mxu0 %v1672
      %1712 = vmatpush1.msra.mxu0 %v1671
      %1713 = vmatprep.subr.mxu0 %v1674
      %1714 = vmatpush1.msra.mxu0 %v1673
      %1715 = vmatprep.subr.mxu0 %v1676
      %1716 = vmatpush1.msra.mxu0 %v1675
      %1717 = vmatprep.subr.mxu0 0.0
      %1718 = vmatpush1.msra.mxu0 0.0
      %1719 = vmatprep.subr.mxu0 0.0
      %1720 = vmatpush1.msra.mxu0 0.0
      %1721 = vmatprep.subr.mxu0 0.0
      %1722 = vmatpush1.msra.mxu0 0.0
      %1723 = vmatprep.subr.mxu0 0.0
      %1724 = vmatpush1.msra.mxu0 0.0
      %1725 = vmatprep.subr.mxu0 0.0
      %1726 = vmatpush1.msra.mxu0 0.0
      %1727 = vmatprep.subr.mxu0 0.0
      %1728 = vmatpush1.msra.mxu0 0.0
      %1729 = vmatprep.subr.mxu0 0.0
      %1730 = vmatpush1.msra.mxu0 0.0
      %1731 = vmatprep.subr.mxu0 0.0
      %1732 = vmatpush1.msra.mxu0 0.0
      %1733 = vmatprep.subr.mxu0 0.0
      %1734 = vmatpush1.msra.mxu0 0.0
      %1735 = vmatprep.subr.mxu0 0.0
      %1736 = vmatpush1.msra.mxu0 0.0
      %1737 = vmatprep.subr.mxu0 0.0
      %1738 = vmatpush1.msra.mxu0 0.0
      %1739 = vmatprep.subr.mxu0 0.0
      %1740 = vmatpush1.msra.mxu0 0.0
      %1741 = vmatprep.subr.mxu0 0.0
      %1742 = vmatpush1.msra.mxu0 0.0
      %1743 = vmatprep.subr.mxu0 0.0
      %1744 = vmatpush1.msra.mxu0 0.0
      %1745 = vmatprep.subr.mxu0 0.0
      %1746 = vmatpush1.msra.mxu0 0.0
      %1747 = vmatprep.subr.mxu0 0.0
      %1748 = vmatpush1.msra.mxu0 0.0
      %1749 = vmatprep.subr.mxu0 0.0
      %1750 = vmatpush1.msra.mxu0 0.0
      %1751 = vmatprep.subr.mxu0 0.0
      %1752 = vmatpush1.msra.mxu0 0.0
      %1753 = vmatprep.subr.mxu0 0.0
      %1754 = vmatpush1.msra.mxu0 0.0
      %1755 = vmatprep.subr.mxu0 0.0
      %1756 = vmatpush1.msra.mxu0 0.0
      %1757 = vmatprep.subr.mxu0 0.0
      %1758 = vmatpush1.msra.mxu0 0.0
      %1759 = vmatprep.subr.mxu0 0.0
      %1760 = vmatpush1.msra.mxu0 0.0
      %1761 = vmatprep.subr.mxu0 0.0
      %1762 = vmatpush1.msra.mxu0 0.0
      %1763 = vmatprep.mubr.f32.mxu0 0.0
      %1764 = vmatmul.mubr.f32.gmra.mrb[0].mxu0 %v1697
      %v1765 = vpop.f32.mrb[0].mxu0
      %v1766 = vadd.f32 %v1575, %v1765
      %v1767 = vpop.f32.mrb[0].mxu0
      %v1768 = vadd.f32 %v1575, %v1767
      %1769 = vdwg.mxu0
      %v1770 = vld [vmem:[%s843] sm:$0xff]
      %vm1771 = vcmp.ge.f32.partialorder %v1766, 0.0
      %vm1772 = vcmp.ge.f32.partialorder %v1768, 0.0
      %1774 = vset.pattern.permute.xlu0 0
      %1775 = vperm.xlu0 %1774, %v1770
      %v1776 = vpop.permute.xlu0 %1775
      %v1778 = vmul.f32 %v1776, %v1766
      %v1779 = vmul.f32 %v1776, %v1768
      %v1780 = vsel %vm1771, %v1766, %v1778
      %v1781 = vsel %vm1772, %v1768, %v1779
      %v1782 = vld [vmem:[%s847] sm:$0xff]
      %v1783 = vld [vmem:[%s851] sm:$0xff]
      %1785 = vset.pattern.permute.xlu0 0
      %1786 = vperm.xlu0 %1785, %v1783
      %v1787 = vpop.permute.xlu0 %1786
      %v1790 = vsel %vm1237, %v1782, 0
      %1792 = vmatprep.subr.mxu0 %v1781
      %1793 = vmatpush1.msra.mxu0 %v1780
      %1794 = vmatprep.subr.mxu0 0.0
      %1795 = vmatpush1.msra.mxu0 0.0
      %1796 = vmatprep.subr.mxu0 0.0
      %1797 = vmatpush1.msra.mxu0 0.0
      %1798 = vmatprep.subr.mxu0 0.0
      %1799 = vmatpush1.msra.mxu0 0.0
      %1800 = vmatprep.subr.mxu0 0.0
      %1801 = vmatpush1.msra.mxu0 0.0
      %1802 = vmatprep.subr.mxu0 0.0
      %1803 = vmatpush1.msra.mxu0 0.0
      %1804 = vmatprep.subr.mxu0 0.0
      %1805 = vmatpush1.msra.mxu0 0.0
      %1806 = vmatprep.subr.mxu0 0.0
      %1807 = vmatpush1.msra.mxu0 0.0
      %1808 = vmatprep.subr.mxu0 0.0
      %1809 = vmatpush1.msra.mxu0 0.0
      %1810 = vmatprep.subr.mxu0 0.0
      %1811 = vmatpush1.msra.mxu0 0.0
      %1812 = vmatprep.subr.mxu0 0.0
      %1813 = vmatpush1.msra.mxu0 0.0
      %1814 = vmatprep.subr.mxu0 0.0
      %1815 = vmatpush1.msra.mxu0 0.0
      %1816 = vmatprep.subr.mxu0 0.0
      %1817 = vmatpush1.msra.mxu0 0.0
      %1818 = vmatprep.subr.mxu0 0.0
      %1819 = vmatpush1.msra.mxu0 0.0
      %1820 = vmatprep.subr.mxu0 0.0
      %1821 = vmatpush1.msra.mxu0 0.0
      %1822 = vmatprep.subr.mxu0 0.0
      %1823 = vmatpush1.msra.mxu0 0.0
      %1824 = vmatprep.subr.mxu0 0.0
      %1825 = vmatpush1.msra.mxu0 0.0
      %1826 = vmatprep.subr.mxu0 0.0
      %1827 = vmatpush1.msra.mxu0 0.0
      %1828 = vmatprep.subr.mxu0 0.0
      %1829 = vmatpush1.msra.mxu0 0.0
      %1830 = vmatprep.subr.mxu0 0.0
      %1831 = vmatpush1.msra.mxu0 0.0
      %1832 = vmatprep.subr.mxu0 0.0
      %1833 = vmatpush1.msra.mxu0 0.0
      %1834 = vmatprep.subr.mxu0 0.0
      %1835 = vmatpush1.msra.mxu0 0.0
      %1836 = vmatprep.subr.mxu0 0.0
      %1837 = vmatpush1.msra.mxu0 0.0
      %1838 = vmatprep.subr.mxu0 0.0
      %1839 = vmatpush1.msra.mxu0 0.0
      %1840 = vmatprep.subr.mxu0 0.0
      %1841 = vmatpush1.msra.mxu0 0.0
      %1842 = vmatprep.subr.mxu0 0.0
      %1843 = vmatpush1.msra.mxu0 0.0
      %1844 = vmatprep.subr.mxu0 0.0
      %1845 = vmatpush1.msra.mxu0 0.0
      %1846 = vmatprep.subr.mxu0 0.0
      %1847 = vmatpush1.msra.mxu0 0.0
      %1848 = vmatprep.subr.mxu0 0.0
      %1849 = vmatpush1.msra.mxu0 0.0
      %1850 = vmatprep.subr.mxu0 0.0
      %1851 = vmatpush1.msra.mxu0 0.0
      %1852 = vmatprep.subr.mxu0 0.0
      %1853 = vmatpush1.msra.mxu0 0.0
      %1854 = vmatprep.subr.mxu0 0.0
      %1855 = vmatpush1.msra.mxu0 0.0
      %1856 = vmatprep.mubr.f32.mxu0 0.0
      %1857 = vmatmul.mubr.f32.gmra.mrb[0].mxu0 %v1790
      %v1858 = vpop.f32.mrb[0].mxu0
      %v1859 = vadd.f32 %v1787, %v1858
      %v1860 = vpop.f32.mrb[0].mxu0
      %v1861 = vadd.f32 %v1787, %v1860
      %1862 = vdwg.mxu0
      %v1863 = vld [vmem:[%s855] sm:$0xff]
      %vm1864 = vcmp.ge.f32.partialorder %v1859, 0.0
      %vm1865 = vcmp.ge.f32.partialorder %v1861, 0.0
      %1867 = vset.pattern.permute.xlu0 0
      %1868 = vperm.xlu0 %1867, %v1863
      %v1869 = vpop.permute.xlu0 %1868
      %v1871 = vmul.f32 %v1869, %v1859
      %v1872 = vmul.f32 %v1869, %v1861
      %v1873 = vsel %vm1864, %v1859, %v1871
      %v1874 = vsel %vm1865, %v1861, %v1872
      %v1875 = vld [vmem:[%s859] sm:$0xff]
      %v1878 = vunpack.c.l.s4 1983009808
      %v1879 = vunpack.c.0.s8 %v1878
      %v1880 = vlaneseq
      %v1881 = vshrl.u32 %v1880, 7
      %v1882 = vsub.s32 %v1879, %v1881
      %v1883 = vrot.slane %v870, %v1882
      %v1884 = vcombine.high %v1883, %v1883
      %vm1885 = vcmask 15360
      %v1887 = vsel %vm1885, %v1875, 0
      %v1889 = vsel %vm1034, %v1883, 0
      %v1891 = vsel %vm1034, %v1884, 0
      %1893 = vmatprep.subr.mxu0 %v1891
      %1894 = vmatpush1.msra.mxu0 %v1889
      %1895 = vmatprep.subr.mxu0 0.0
      %1896 = vmatpush1.msra.mxu0 0.0
      %1897 = vmatprep.subr.mxu0 0.0
      %1898 = vmatpush1.msra.mxu0 0.0
      %1899 = vmatprep.subr.mxu0 0.0
      %1900 = vmatpush1.msra.mxu0 0.0
      %1901 = vmatprep.subr.mxu0 0.0
      %1902 = vmatpush1.msra.mxu0 0.0
      %1903 = vmatprep.subr.mxu0 0.0
      %1904 = vmatpush1.msra.mxu0 0.0
      %1905 = vmatprep.subr.mxu0 0.0
      %1906 = vmatpush1.msra.mxu0 0.0
      %1907 = vmatprep.subr.mxu0 0.0
      %1908 = vmatpush1.msra.mxu0 0.0
      %1909 = vmatprep.subr.mxu0 0.0
      %1910 = vmatpush1.msra.mxu0 0.0
      %1911 = vmatprep.subr.mxu0 0.0
      %1912 = vmatpush1.msra.mxu0 0.0
      %1913 = vmatprep.subr.mxu0 0.0
      %1914 = vmatpush1.msra.mxu0 0.0
      %1915 = vmatprep.subr.mxu0 0.0
      %1916 = vmatpush1.msra.mxu0 0.0
      %1917 = vmatprep.subr.mxu0 0.0
      %1918 = vmatpush1.msra.mxu0 0.0
      %1919 = vmatprep.subr.mxu0 0.0
      %1920 = vmatpush1.msra.mxu0 0.0
      %1921 = vmatprep.subr.mxu0 0.0
      %1922 = vmatpush1.msra.mxu0 0.0
      %1923 = vmatprep.subr.mxu0 0.0
      %1924 = vmatpush1.msra.mxu0 0.0
      %1925 = vmatprep.subr.mxu0 0.0
      %1926 = vmatpush1.msra.mxu0 0.0
      %1927 = vmatprep.subr.mxu0 0.0
      %1928 = vmatpush1.msra.mxu0 0.0
      %1929 = vmatprep.subr.mxu0 0.0
      %1930 = vmatpush1.msra.mxu0 0.0
      %1931 = vmatprep.subr.mxu0 0.0
      %1932 = vmatpush1.msra.mxu0 0.0
      %1933 = vmatprep.subr.mxu0 0.0
      %1934 = vmatpush1.msra.mxu0 0.0
      %1935 = vmatprep.subr.mxu0 0.0
      %1936 = vmatpush1.msra.mxu0 0.0
      %1937 = vmatprep.subr.mxu0 0.0
      %1938 = vmatpush1.msra.mxu0 0.0
      %1939 = vmatprep.subr.mxu0 0.0
      %1940 = vmatpush1.msra.mxu0 0.0
      %1941 = vmatprep.subr.mxu0 0.0
      %1942 = vmatpush1.msra.mxu0 0.0
      %1943 = vmatprep.subr.mxu0 0.0
      %1944 = vmatpush1.msra.mxu0 0.0
      %1945 = vmatprep.subr.mxu0 0.0
      %1946 = vmatpush1.msra.mxu0 0.0
      %1947 = vmatprep.subr.mxu0 0.0
      %1948 = vmatpush1.msra.mxu0 0.0
      %1949 = vmatprep.subr.mxu0 0.0
      %1950 = vmatpush1.msra.mxu0 0.0
      %1951 = vmatprep.subr.mxu0 0.0
      %1952 = vmatpush1.msra.mxu0 0.0
      %1953 = vmatprep.subr.mxu0 0.0
      %1954 = vmatpush1.msra.mxu0 0.0
      %1955 = vmatprep.subr.mxu0 0.0
      %1956 = vmatpush1.msra.mxu0 0.0
      %1957 = vmatprep.mubr.f32.mxu0 0.0
      %1958 = vmatmul.mubr.f32.gmra.mrb[0].mxu0 %v1887
      %v1959 = vpop.f32.mrb[0].mxu0
      %v1960 = vadd.f32 0.0, %v1959
      %v1961 = vpop.f32.mrb[0].mxu0
      %v1962 = vadd.f32 0.0, %v1961
      %1963 = vdwg.mxu0
      %v1964 = vadd.f32 %v1960, %v1962
      %1965 = vadd.xlane.f32.xlu0 %v1964
      %v1966 = vpop.xlane.xlu0 %1965
      %v1967 = vrcp.pop 256.0
      %v1968 = vmul.f32 %v1966, %v1967
      %v1969 = vadd.f32 %v1873, %v1968
      %v1970 = vadd.f32 %v1874, %v1968
      %p1971 = scmp.eq.s32.totalorder %s35, 0
      // Predicated region
      $region97: #{spfm_forward.1} parent=95 // pred_check
        %p1972 = pneg %p1971
      $region98: #{spfm_forward.1} parent=95 // pred_check_branch
        %1974 = sbr.rel (%p1972) target = $region100
      $region99: #{spfm_forward.1} parent=95 // pred_region
        %1975 = vst [vmem:[#allocation4] sm:$0xff] 0.0
        %1976 = vst [vmem:[#allocation4 + $0x8] sm:$0xff] 0.0
        %1977 = vst [vmem:[#allocation4 + $0x10] sm:$0xff] 0.0
        %1978 = vst [vmem:[#allocation4 + $0x18] sm:$0xff] 0.0
        %1979 = vst [vmem:[#allocation4 + $0x20] sm:$0xff] 0.0
        %1980 = vst [vmem:[#allocation4 + $0x28] sm:$0xff] 0.0
        %1981 = vst [vmem:[#allocation4 + $0x30] sm:$0xff] 0.0
        %1982 = vst [vmem:[#allocation4 + $0x38] sm:$0xff] 0.0
      $region100: #{spfm_forward.1} parent=95 // pred_fallthru
        _
      %v1983 = vld [vmem:[#allocation4] sm:$0xff]
      %v1984 = vld [vmem:[#allocation4 + $0x8] sm:$0xff]
      %v1985 = vld [vmem:[#allocation4 + $0x10] sm:$0xff]
      %v1986 = vld [vmem:[#allocation4 + $0x18] sm:$0xff]
      %v1987 = vld [vmem:[#allocation4 + $0x20] sm:$0xff]
      %v1988 = vld [vmem:[#allocation4 + $0x28] sm:$0xff]
      %v1989 = vld [vmem:[#allocation4 + $0x30] sm:$0xff]
      %v1990 = vld [vmem:[#allocation4 + $0x38] sm:$0xff]
      %v1991 = vld [vmem:[%s864] sm:$0xff]
      %v1992 = vld [vmem:[%s864 + $0x8] sm:$0xff]
      %v1993 = vld [vmem:[%s864 + $0x10] sm:$0xff]
      %v1994 = vld [vmem:[%s864 + $0x18] sm:$0xff]
      %v1996 = vsel %vm1237, %v1991, 0
      %v1999 = vsel %vm1237, %v1992, 0
      %v2002 = vsel %vm1237, %v1993, 0
      %v2005 = vsel %vm1237, %v1994, 0
      %2007 = vmatprep.subr.mxu0 %v1970
      %2008 = vmatpush1.msra.mxu0 %v1969
      %2009 = vmatprep.subr.mxu0 0.0
      %2010 = vmatpush1.msra.mxu0 0.0
      %2011 = vmatprep.subr.mxu0 0.0
      %2012 = vmatpush1.msra.mxu0 0.0
      %2013 = vmatprep.subr.mxu0 0.0
      %2014 = vmatpush1.msra.mxu0 0.0
      %2015 = vmatprep.subr.mxu0 0.0
      %2016 = vmatpush1.msra.mxu0 0.0
      %2017 = vmatprep.subr.mxu0 0.0
      %2018 = vmatpush1.msra.mxu0 0.0
      %2019 = vmatprep.subr.mxu0 0.0
      %2020 = vmatpush1.msra.mxu0 0.0
      %2021 = vmatprep.subr.mxu0 0.0
      %2022 = vmatpush1.msra.mxu0 0.0
      %2023 = vmatprep.subr.mxu0 0.0
      %2024 = vmatpush1.msra.mxu0 0.0
      %2025 = vmatprep.subr.mxu0 0.0
      %2026 = vmatpush1.msra.mxu0 0.0
      %2027 = vmatprep.subr.mxu0 0.0
      %2028 = vmatpush1.msra.mxu0 0.0
      %2029 = vmatprep.subr.mxu0 0.0
      %2030 = vmatpush1.msra.mxu0 0.0
      %2031 = vmatprep.subr.mxu0 0.0
      %2032 = vmatpush1.msra.mxu0 0.0
      %2033 = vmatprep.subr.mxu0 0.0
      %2034 = vmatpush1.msra.mxu0 0.0
      %2035 = vmatprep.subr.mxu0 0.0
      %2036 = vmatpush1.msra.mxu0 0.0
      %2037 = vmatprep.subr.mxu0 0.0
      %2038 = vmatpush1.msra.mxu0 0.0
      %2039 = vmatprep.subr.mxu0 0.0
      %2040 = vmatpush1.msra.mxu0 0.0
      %2041 = vmatprep.subr.mxu0 0.0
      %2042 = vmatpush1.msra.mxu0 0.0
      %2043 = vmatprep.subr.mxu0 0.0
      %2044 = vmatpush1.msra.mxu0 0.0
      %2045 = vmatprep.subr.mxu0 0.0
      %2046 = vmatpush1.msra.mxu0 0.0
      %2047 = vmatprep.subr.mxu0 0.0
      %2048 = vmatpush1.msra.mxu0 0.0
      %2049 = vmatprep.subr.mxu0 0.0
      %2050 = vmatpush1.msra.mxu0 0.0
      %2051 = vmatprep.subr.mxu0 0.0
      %2052 = vmatpush1.msra.mxu0 0.0
      %2053 = vmatprep.subr.mxu0 0.0
      %2054 = vmatpush1.msra.mxu0 0.0
      %2055 = vmatprep.subr.mxu0 0.0
      %2056 = vmatpush1.msra.mxu0 0.0
      %2057 = vmatprep.subr.mxu0 0.0
      %2058 = vmatpush1.msra.mxu0 0.0
      %2059 = vmatprep.subr.mxu0 0.0
      %2060 = vmatpush1.msra.mxu0 0.0
      %2061 = vmatprep.subr.mxu0 0.0
      %2062 = vmatpush1.msra.mxu0 0.0
      %2063 = vmatprep.subr.mxu0 0.0
      %2064 = vmatpush1.msra.mxu0 0.0
      %2065 = vmatprep.subr.mxu0 0.0
      %2066 = vmatpush1.msra.mxu0 0.0
      %2067 = vmatprep.subr.mxu0 0.0
      %2068 = vmatpush1.msra.mxu0 0.0
      %2069 = vmatprep.subr.mxu0 0.0
      %2070 = vmatpush1.msra.mxu0 0.0
      %2071 = vmatprep.mubr.f32.mxu0 0.0
      %2072 = vmatmul.mubr.f32.gmra.mrb[0].mxu0 %v1996
      %v2073 = vpop.f32.mrb[0].mxu0
      %v2074 = vadd.f32 0.0, %v2073
      %v2075 = vpop.f32.mrb[0].mxu0
      %v2076 = vadd.f32 0.0, %v2075
      %2077 = vmatprep.mubr.f32.mxu0 0.0
      %2078 = vmatmul.mubr.f32.gmra.mrb[0].mxu0 %v1999
      %v2079 = vpop.f32.mrb[0].mxu0
      %v2080 = vadd.f32 0.0, %v2079
      %v2081 = vpop.f32.mrb[0].mxu0
      %v2082 = vadd.f32 0.0, %v2081
      %2083 = vmatprep.mubr.f32.mxu0 0.0
      %2084 = vmatmul.mubr.f32.gmra.mrb[0].mxu0 %v2002
      %v2085 = vpop.f32.mrb[0].mxu0
      %v2086 = vadd.f32 0.0, %v2085
      %v2087 = vpop.f32.mrb[0].mxu0
      %v2088 = vadd.f32 0.0, %v2087
      %2089 = vmatprep.mubr.f32.mxu0 0.0
      %2090 = vmatmul.mubr.f32.gmra.mrb[0].mxu0 %v2005
      %v2091 = vpop.f32.mrb[0].mxu0
      %v2092 = vadd.f32 0.0, %v2091
      %v2093 = vpop.f32.mrb[0].mxu0
      %v2094 = vadd.f32 0.0, %v2093
      %2095 = vdwg.mxu0
      %v2096 = vadd.f32 %v1983, %v2074
      %v2097 = vadd.f32 %v1984, %v2076
      %v2098 = vadd.f32 %v1985, %v2080
      %v2099 = vadd.f32 %v1986, %v2082
      %v2100 = vadd.f32 %v1987, %v2086
      %v2101 = vadd.f32 %v1988, %v2088
      %v2102 = vadd.f32 %v1989, %v2092
      %v2103 = vadd.f32 %v1990, %v2094
      %2104 = vst [vmem:[#allocation4] sm:$0xff] %v2096
      %2105 = vst [vmem:[#allocation4 + $0x8] sm:$0xff] %v2097
      %2106 = vst [vmem:[#allocation4 + $0x10] sm:$0xff] %v2098
      %2107 = vst [vmem:[#allocation4 + $0x18] sm:$0xff] %v2099
      %2108 = vst [vmem:[#allocation4 + $0x20] sm:$0xff] %v2100
      %2109 = vst [vmem:[#allocation4 + $0x28] sm:$0xff] %v2101
      %2110 = vst [vmem:[#allocation4 + $0x30] sm:$0xff] %v2102
      %2111 = vst [vmem:[#allocation4 + $0x38] sm:$0xff] %v2103
      %p2112 = scmp.eq.s32.totalorder %s35, 1
      // Predicated region
      $region101: #{spfm_forward.1} parent=95 // pred_check
        %p2113 = pneg %p2112
      $region102: #{spfm_forward.1} parent=95 // pred_check_branch
        %2115 = sbr.rel (%p2113) target = $region104
      $region103: #{spfm_forward.1} parent=95 // pred_region
        %v2116 = vld [vmem:[#allocation4] sm:$0xff]
        %v2117 = vld [vmem:[#allocation4 + $0x8] sm:$0xff]
        %v2118 = vld [vmem:[#allocation4 + $0x10] sm:$0xff]
        %v2119 = vld [vmem:[#allocation4 + $0x18] sm:$0xff]
        %v2120 = vld [vmem:[#allocation4 + $0x20] sm:$0xff]
        %v2121 = vld [vmem:[#allocation4 + $0x28] sm:$0xff]
        %v2122 = vld [vmem:[#allocation4 + $0x30] sm:$0xff]
        %v2123 = vld [vmem:[#allocation4 + $0x38] sm:$0xff]
        %v2124 = vld [vmem:[%s15] sm:$0xff]
        %v2125 = vld [vmem:[%s15 + $0x8] sm:$0xff]
        %v2126 = vld [vmem:[%s15 + $0x10] sm:$0xff]
        %v2127 = vld [vmem:[%s15 + $0x18] sm:$0xff]
        %2129 = vset.pattern.permute.xlu0 0
        %2130 = vperm.xlu0 %2129, %v2124
        %v2131 = vpop.permute.xlu0 %2130
        %2134 = vset.pattern.permute.xlu0 0
        %2135 = vperm.xlu0 %2134, %v2125
        %v2136 = vpop.permute.xlu0 %2135
        %2139 = vset.pattern.permute.xlu0 0
        %2140 = vperm.xlu0 %2139, %v2126
        %v2141 = vpop.permute.xlu0 %2140
        %2144 = vset.pattern.permute.xlu0 0
        %2145 = vperm.xlu0 %2144, %v2127
        %v2146 = vpop.permute.xlu0 %2145
        %v2148 = vadd.f32 %v2116, %v2131
        %v2149 = vadd.f32 %v2117, %v2131
        %v2150 = vadd.f32 %v2118, %v2136
        %v2151 = vadd.f32 %v2119, %v2136
        %v2152 = vadd.f32 %v2120, %v2141
        %v2153 = vadd.f32 %v2121, %v2141
        %v2154 = vadd.f32 %v2122, %v2146
        %v2155 = vadd.f32 %v2123, %v2146
        %v2156 = vld [vmem:[%s16] sm:$0xff]
        %v2157 = vld [vmem:[%s16 + $0x8] sm:$0xff]
        %v2158 = vld [vmem:[%s16 + $0x10] sm:$0xff]
        %v2159 = vld [vmem:[%s16 + $0x18] sm:$0xff]
        %vm2160 = vcmp.ge.f32.partialorder %v2148, 0.0
        %vm2161 = vcmp.ge.f32.partialorder %v2149, 0.0
        %vm2162 = vcmp.ge.f32.partialorder %v2150, 0.0
        %vm2163 = vcmp.ge.f32.partialorder %v2151, 0.0
        %vm2164 = vcmp.ge.f32.partialorder %v2152, 0.0
        %vm2165 = vcmp.ge.f32.partialorder %v2153, 0.0
        %vm2166 = vcmp.ge.f32.partialorder %v2154, 0.0
        %vm2167 = vcmp.ge.f32.partialorder %v2155, 0.0
        %2169 = vset.pattern.permute.xlu0 0
        %2170 = vperm.xlu0 %2169, %v2156
        %v2171 = vpop.permute.xlu0 %2170
        %2174 = vset.pattern.permute.xlu0 0
        %2175 = vperm.xlu0 %2174, %v2157
        %v2176 = vpop.permute.xlu0 %2175
        %2179 = vset.pattern.permute.xlu0 0
        %2180 = vperm.xlu0 %2179, %v2158
        %v2181 = vpop.permute.xlu0 %2180
        %2184 = vset.pattern.permute.xlu0 0
        %2185 = vperm.xlu0 %2184, %v2159
        %v2186 = vpop.permute.xlu0 %2185
        %v2188 = vmul.f32 %v2171, %v2148
        %v2189 = vmul.f32 %v2171, %v2149
        %v2190 = vmul.f32 %v2176, %v2150
        %v2191 = vmul.f32 %v2176, %v2151
        %v2192 = vmul.f32 %v2181, %v2152
        %v2193 = vmul.f32 %v2181, %v2153
        %v2194 = vmul.f32 %v2186, %v2154
        %v2195 = vmul.f32 %v2186, %v2155
        %v2196 = vsel %vm2160, %v2148, %v2188
        %v2197 = vsel %vm2161, %v2149, %v2189
        %v2198 = vsel %vm2162, %v2150, %v2190
        %v2199 = vsel %vm2163, %v2151, %v2191
        %v2200 = vsel %vm2164, %v2152, %v2192
        %v2201 = vsel %vm2165, %v2153, %v2193
        %v2202 = vsel %vm2166, %v2154, %v2194
        %v2203 = vsel %vm2167, %v2155, %v2195
        %2204 = vst [vmem:[%s869] sm:$0xff] %v2196
        %2205 = vst [vmem:[%s869 + $0x8] sm:$0xff] %v2197
        %2206 = vst [vmem:[%s869 + $0x10] sm:$0xff] %v2198
        %2207 = vst [vmem:[%s869 + $0x18] sm:$0xff] %v2199
        %2208 = vst [vmem:[%s869 + $0x20] sm:$0xff] %v2200
        %2209 = vst [vmem:[%s869 + $0x28] sm:$0xff] %v2201
        %2210 = vst [vmem:[%s869 + $0x30] sm:$0xff] %v2202
        %2211 = vst [vmem:[%s869 + $0x38] sm:$0xff] %v2203
      $region104: #{spfm_forward.1} parent=95 // pred_fallthru
        _
      %p2212 = scmp.lt.s32.totalorder %s34, 1
      %s2213 = scalar_select %p2212, %s34, 1
      %s2214 = smul.addr %s2213, 8
      %s2215 = smul.addr %s2214, 8
      %s2216 = scalar_lea.vmem %s19, %s2215
      // Predicated region
      $region105: #{spfm_forward.1} parent=95 // pred_check
        %p2217 = pneg %p536
      $region106: #{spfm_forward.1} parent=95 // pred_check_branch
        %2219 = sbr.rel (%p2217) target = $region108
      $region107: #{spfm_forward.1} parent=95 // pred_region
        _
      $region108: #{spfm_forward.1} parent=95 // pred_fallthru
        _
    $region96: #{spfm_forward.1} parent=5 // pred_fallthru
      _
    %p2220 = scmp.le.s32.totalorder 2, %s25
    // Predicated region
    $region109: #{spfm_forward.1} parent=5 // pred_check
      %p2221 = pneg %p2220
    $region110: #{spfm_forward.1} parent=5 // pred_check_branch
      %2223 = sbr.rel (%p2221) target = $region112
    $region111: #{spfm_forward.1} parent=5 // pred_region
      %s2224 = ssub.s32 %s25, 2
      // Predicated region
      $region113: #{spfm_forward.1} parent=111 // pred_check
        %p2225 = pneg %p542
      $region114: #{spfm_forward.1} parent=111 // pred_check_branch
        %2227 = sbr.rel (%p2225) target = $region116
      $region115: #{spfm_forward.1} parent=111 // pred_region
        %p2228 = scmp.lt.s32.totalorder %s36, 1
        %s2229 = scalar_select %p2228, %s36, 1
        %s2230 = smul.addr %s2229, 8
        %s2231 = smul.addr %s2230, 8
        %s2232 = scalar_lea.vmem %s19, %s2231
      $region116: #{spfm_forward.1} parent=111 // pred_fallthru
        _
    $region112: #{spfm_forward.1} parent=5 // pred_fallthru
      _
  $region6: #{spfm_forward.1} parent=0 // loop_footer
    %s29 = sadd.s32 1, %s25
  $region7: #{spfm_forward.1} parent=0 // loop_footer_branch
    %24 = sbr.rel target = $region3
  $region8: #{spfm_forward.1} parent=0 // loop_exit
    _

</llo_original>
